<compile_context>
chip_gen: v6e
topology: v6e:2x2x1
jax: 0.10.0
libtpu: 0.0.40
codegen_flags: <defaults>
</compile_context>

<pallas_src>
import functools

import jax
import jax.numpy as jnp
from jax.experimental import pallas as pl
from jax.experimental.pallas import tpu as pltpu

HIDDEN = 256


def _round_up(x, m):
    return -(-x // m) * m


# ----------------------------------------------------------------------------
# Kernel
# ----------------------------------------------------------------------------
def _dueling_kernel(s_pad, a_pad,
                    state_ref, action_ref,
                    w_sa_ref, w_hid_ref, w_sel_ref, b_hid_ref, b_out_ref,
                    out_ref):
    f32 = jnp.float32
    H = HIDDEN

    s = state_ref[...].astype(f32)     # (tm, s_pad)  zero-padded lanes
    a = action_ref[...].astype(f32)    # (tm, a_pad)

    def mm(x, w):
        return jnp.dot(x, w, preferred_element_type=f32)

    def relu(x):
        return jnp.maximum(x, 0.0)

    b = b_hid_ref[...]                 # (8, 256): rows 0..5 = b1,b2,b3,b4,b5,b6

    # Fused first layers of both heads:  [s@w1 | s@w4]   -> (tm, 512)
    h12 = mm(s, w_sa_ref[0:s_pad, :])
    # Fused action projections of both heads: [a@w3a | a@w6a] -> (tm, 512)
    a12 = mm(a, w_sa_ref[s_pad:s_pad + a_pad, :])

    h1 = relu(h12[:, 0:H] + b[0:1, :])
    h2 = relu(h12[:, H:2 * H] + b[3:4, :])

    # Hidden weights slab: columns [w2 | w3f | w5 | w6f]
    feat = relu(mm(h1, w_hid_ref[:, 0:H]) + b[1:2, :])
    feat2 = relu(mm(h2, w_hid_ref[:, 2 * H:3 * H]) + b[4:5, :])

    adv_h = relu(mm(feat, w_hid_ref[:, H:2 * H]) + a12[:, 0:H] + b[2:3, :])
    adv2_h = relu(mm(feat2, w_hid_ref[:, 3 * H:4 * H]) + a12[:, H:2 * H] + b[5:6, :])

    # All four N=1 output projections + the value+adv sums as one narrow matmul
    # against a packed (1024, 8) selector; columns:
    #   [value, adv, value+adv, value2, adv2, value2+adv2, 0, 0]
    x_cat = jnp.concatenate([feat, adv_h, feat2, adv2_h], axis=-1)   # (tm, 1024)
    out = mm(x_cat, w_sel_ref[...]) + b_out_ref[...]                 # (tm, 8)

    out_ref[...] = out.astype(out_ref.dtype)


# ----------------------------------------------------------------------------
# Parameter construction / packing
# ----------------------------------------------------------------------------
def init_params(key, state_dim, action_dim, dtype=jnp.float32):
    """Deterministic synthetic parameters (PyTorch-default-style uniform init).

    Weights: (in_features, out_features).  Biases: (1, out_features).
    l3/l6 (which consume cat([feat, action])) are stored split into the feature
    part (HIDDEN, HIDDEN) and the action part (action_dim, HIDDEN).
    """
    shapes = {
        "w1": (state_dim, HIDDEN), "b1": (1, HIDDEN),
        "w2": (HIDDEN, HIDDEN),    "b2": (1, HIDDEN),
        "wv": (HIDDEN, 1),         "bv": (1, 1),
        "w3f": (HIDDEN, HIDDEN),   "w3a": (action_dim, HIDDEN), "b3": (1, HIDDEN),
        "wa": (HIDDEN, 1),         "ba": (1, 1),
        "w4": (state_dim, HIDDEN), "b4": (1, HIDDEN),
        "w5": (HIDDEN, HIDDEN),    "b5": (1, HIDDEN),
        "wv2": (HIDDEN, 1),        "bv2": (1, 1),
        "w6f": (HIDDEN, HIDDEN),   "w6a": (action_dim, HIDDEN), "b6": (1, HIDDEN),
        "wa2": (HIDDEN, 1),        "ba2": (1, 1),
    }
    params = {}
    keys = jax.random.split(key, len(shapes))
    for k, (name, shape) in zip(keys, sorted(shapes.items())):
        fan_in = shape[0] if shape[0] > 1 else HIDDEN
        bound = 1.0 / jnp.sqrt(jnp.asarray(fan_in, dtype))
        params[name] = jax.random.uniform(
            k, shape, dtype=dtype, minval=-bound, maxval=bound)
    return params


def _pack_params(params, state_dim, action_dim, dtype=jnp.float32):
    """Pack the 24 parameter arrays into 5 DMA-friendly slabs."""
    p = params
    s_pad = _round_up(state_dim, 8)
    a_pad = _round_up(action_dim, 8)

    # Slab 1: first-layer + action weights, row-stacked.
    w14 = jnp.concatenate([p["w1"], p["w4"]], axis=1)            # (S, 512)
    w14 = jnp.pad(w14, ((0, s_pad - state_dim), (0, 0)))
    w36a = jnp.concatenate([p["w3a"], p["w6a"]], axis=1)         # (A, 512)
    w36a = jnp.pad(w36a, ((0, a_pad - action_dim), (0, 0)))
    w_sa = jnp.concatenate([w14, w36a], axis=0).astype(dtype)    # (S_pad+A_pad, 512)

    # Slab 2: hidden weights [w2 | w3f | w5 | w6f].
    w_hid = jnp.concatenate(
        [p["w2"], p["w3f"], p["w5"], p["w6f"]], axis=1).astype(dtype)  # (256, 1024)

    # Slab 3: packed output-projection selector (1024, 8).
    z = jnp.zeros((HIDDEN, 1), dtype)
    wv, wa, wv2, wa2 = (p[k].astype(dtype) for k in ("wv", "wa", "wv2", "wa2"))
    w_sel = jnp.concatenate([
        jnp.concatenate([wv, z,  wv, z,   z,   z,   z, z], axis=1),  # rows for feat
        jnp.concatenate([z,  wa, wa, z,   z,   z,   z, z], axis=1),  # rows for adv_h
        jnp.concatenate([z,  z,  z,  wv2, z,   wv2, z, z], axis=1),  # rows for feat2
        jnp.concatenate([z,  z,  z,  z,   wa2, wa2, z, z], axis=1),  # rows for adv2_h
    ], axis=0)                                                       # (1024, 8)

    # Slab 4: hidden biases, rows [b1, b2, b3, b4, b5, b6] (+2 pad rows).
    b_hid = jnp.concatenate(
        [p["b1"], p["b2"], p["b3"], p["b4"], p["b5"], p["b6"]], axis=0)
    b_hid = jnp.pad(b_hid, ((0, 2), (0, 0))).astype(dtype)           # (8, 256)

    # Slab 5: output biases [bv, ba, bv+ba, bv2, ba2, bv2+ba2, 0, 0].
    bv, ba, bv2, ba2 = (p[k].reshape(()) for k in ("bv", "ba", "bv2", "ba2"))
    zero = jnp.zeros((), dtype)
    b_out = jnp.stack(
        [bv, ba, bv + ba, bv2, ba2, bv2 + ba2, zero, zero]).reshape(1, 8).astype(dtype)

    return w_sa, w_hid, w_sel, b_hid, b_out


# ----------------------------------------------------------------------------
# Wrapper
# ----------------------------------------------------------------------------
def dueling_critic_forward(state, action, params, *, block_b=512):
    B, state_dim = state.shape
    Ba, action_dim = action.shape
    assert Ba == B
    out_dtype = state.dtype

    s_pad = _round_up(state_dim, 8)
    a_pad = _round_up(action_dim, 8)

    w_sa, w_hid, w_sel, b_hid, b_out = _pack_params(params, state_dim, action_dim)

    # Pad batch to a sublane multiple; tile it if it exceeds the batch block.
    bp = _round_up(B, 8)
    if bp > block_b:
        tm = block_b
        bp = _round_up(bp, tm)
    else:
        tm = bp
    grid = (bp // tm,)

    state_p = jnp.pad(state, ((0, bp - B), (0, s_pad - state_dim)))
    action_p = jnp.pad(action, ((0, bp - B), (0, a_pad - action_dim)))

    kernel = functools.partial(_dueling_kernel, s_pad, a_pad)

    def batch_spec(width):
        return pl.BlockSpec((tm, width), lambda i: (i, 0))

    def const_spec(arr):
        # Full-array block, constant block index -> stays resident across the grid.
        return pl.BlockSpec(arr.shape, lambda i: (0, 0))

    out = pl.pallas_call(
        kernel,
        out_shape=jax.ShapeDtypeStruct((bp, 8), out_dtype),
        grid=grid,
        in_specs=[
            batch_spec(s_pad),       # state
            batch_spec(a_pad),       # action
            const_spec(w_sa),
            const_spec(w_hid),
            const_spec(w_sel),
            const_spec(b_hid),
            const_spec(b_out),
        ],
        out_specs=pl.BlockSpec((tm, 8), lambda i: (i, 0)),
        compiler_params=pltpu.CompilerParams(
            dimension_semantics=("parallel",)),
    )(state_p, action_p, w_sa, w_hid, w_sel, b_hid, b_out)

    out = out[:B]
    value, adv, q = out[:, 0:1], out[:, 1:2], out[:, 2:3]
    value2, adv2, q2 = out[:, 3:4], out[:, 4:5], out[:, 5:6]
    return value, adv, q, value2, adv2, q2


# ----------------------------------------------------------------------------
# Pure-JAX reference (mirrors the PyTorch forward)
# ----------------------------------------------------------------------------
def _reference_forward(state, action, params):
    def lin(x, w, b):
        return x @ w + b

    relu = lambda x: jnp.maximum(x, 0.0)
    p = params
    feat = relu(lin(relu(lin(state, p["w1"], p["b1"])), p["w2"], p["b2"]))
    value = lin(feat, p["wv"], p["bv"])
    adv = relu(lin(feat, p["w3f"], p["b3"]) + action @ p["w3a"])
    adv = lin(adv, p["wa"], p["ba"])
    feat2 = relu(lin(relu(lin(state, p["w4"], p["b4"])), p["w5"], p["b5"]))
    value2 = lin(feat2, p["wv2"], p["bv2"])
    adv2 = relu(lin(feat2, p["w6f"], p["b6"]) + action @ p["w6a"])
    adv2 = lin(adv2, p["wa2"], p["ba2"])
    return (value, adv, value + adv, value2, adv2, value2 + adv2)


if __name__ == "__main__":
    B, STATE_DIM, ACTION_DIM = 2, 16, 8

    key = jax.random.PRNGKey(0)
    k_state, k_action, k_params = jax.random.split(key, 3)
    state = jax.random.normal(k_state, (B, STATE_DIM), dtype=jnp.float32)
    action = jax.random.normal(k_action, (B, ACTION_DIM), dtype=jnp.float32)
    params = init_params(k_params, STATE_DIM, ACTION_DIM)

    outs = dueling_critic_forward(state, action, params)
    outs = jax.block_until_ready(outs)

    refs = _reference_forward(state, action, params)
    for o, r in zip(outs, refs):
        assert o.shape == (B, 1)
        assert jnp.allclose(o, r, atol=1e-4, rtol=1e-4)

    print("KERNEL_OK")
</pallas_src>

<mosaic_0001>
module attributes {stable_mosaic.version = 11 : i64} {
  func.func @_dueling_kernel(%arg0: i32, %arg1: memref<8x16xf32, #tpu.memory_space<vmem>>, %arg2: memref<8x8xf32, #tpu.memory_space<vmem>>, %arg3: memref<24x512xf32, #tpu.memory_space<vmem>>, %arg4: memref<256x1024xf32, #tpu.memory_space<vmem>>, %arg5: memref<1024x8xf32, #tpu.memory_space<vmem>>, %arg6: memref<8x256xf32, #tpu.memory_space<vmem>>, %arg7: memref<1x8xf32, #tpu.memory_space<vmem>>, %arg8: memref<8x8xf32, #tpu.memory_space<vmem>>) attributes {dimension_semantics = [#tpu.dimension_semantics<parallel>], iteration_bounds = array<i64: 1>, scalar_prefetch = 0 : i64, scratch_operands = 0 : i64, tpu.core_type = #tpu.core_type<tc>, window_params = [{transform_indices = @transform_0, window_bounds = array<i64: 8, 16>}, {transform_indices = @transform_1, window_bounds = array<i64: 8, 8>}, {pipeline_mode = #tpu.pipeline_mode<synchronous>, transform_indices = @transform_2, window_bounds = array<i64: 24, 512>}, {pipeline_mode = #tpu.pipeline_mode<synchronous>, transform_indices = @transform_3, window_bounds = array<i64: 256, 1024>}, {pipeline_mode = #tpu.pipeline_mode<synchronous>, transform_indices = @transform_4, window_bounds = array<i64: 1024, 8>}, {pipeline_mode = #tpu.pipeline_mode<synchronous>, transform_indices = @transform_5, window_bounds = array<i64: 8, 256>}, {pipeline_mode = #tpu.pipeline_mode<synchronous>, transform_indices = @transform_6, window_bounds = array<i64: 1, 8>}, {transform_indices = @transform_7, window_bounds = array<i64: 8, 8>}]} {
    %c0 = arith.constant 0 : index
    %c0_0 = arith.constant 0 : index
    %0 = vector.load %arg1[%c0, %c0_0] : memref<8x16xf32, #tpu.memory_space<vmem>>, vector<8x16xf32>
    %c0_1 = arith.constant 0 : index
    %c0_2 = arith.constant 0 : index
    %1 = vector.load %arg2[%c0_1, %c0_2] : memref<8x8xf32, #tpu.memory_space<vmem>>, vector<8x8xf32>
    %c0_3 = arith.constant 0 : index
    %c0_4 = arith.constant 0 : index
    %2 = vector.load %arg6[%c0_3, %c0_4] : memref<8x256xf32, #tpu.memory_space<vmem>>, vector<8x256xf32>
    %c0_5 = arith.constant 0 : index
    %c0_6 = arith.constant 0 : index
    %3 = vector.load %arg3[%c0_5, %c0_6] : memref<24x512xf32, #tpu.memory_space<vmem>>, vector<16x512xf32>
    %cst = arith.constant dense<0.000000e+00> : vector<8x512xf32>
    %4 = tpu.matmul %0, %3, %cst {dimension_numbers = #tpu.dot_dimension_numbers<[1], [0], [0], [1], [0, 0, 1, 1], [], []>} : vector<8x16xf32>, vector<16x512xf32>, vector<8x512xf32> -> vector<8x512xf32>
    %c16 = arith.constant 16 : index
    %c0_7 = arith.constant 0 : index
    %5 = vector.load %arg3[%c16, %c0_7] : memref<24x512xf32, #tpu.memory_space<vmem>>, vector<8x512xf32>
    %cst_8 = arith.constant dense<0.000000e+00> : vector<8x512xf32>
    %6 = tpu.matmul %1, %5, %cst_8 {dimension_numbers = #tpu.dot_dimension_numbers<[1], [0], [0], [1], [0, 0, 1, 1], [], []>} : vector<8x8xf32>, vector<8x512xf32>, vector<8x512xf32> -> vector<8x512xf32>
    %7 = vector.extract_strided_slice %4 {offsets = [0, 0], sizes = [8, 256], strides = [1, 1]} : vector<8x512xf32> to vector<8x256xf32>
    %8 = vector.extract_strided_slice %2 {offsets = [0, 0], sizes = [1, 256], strides = [1, 1]} : vector<8x256xf32> to vector<1x256xf32>
    %9 = vector.broadcast %8 : vector<1x256xf32> to vector<8x256xf32>
    %10 = arith.addf %7, %9 : vector<8x256xf32>
    %cst_9 = arith.constant 0.000000e+00 : f32
    %11 = vector.broadcast %cst_9 : f32 to vector<8x256xf32>
    %12 = arith.maximumf %10, %11 : vector<8x256xf32>
    %13 = vector.extract_strided_slice %4 {offsets = [0, 256], sizes = [8, 256], strides = [1, 1]} : vector<8x512xf32> to vector<8x256xf32>
    %14 = vector.extract_strided_slice %2 {offsets = [3, 0], sizes = [1, 256], strides = [1, 1]} : vector<8x256xf32> to vector<1x256xf32>
    %15 = vector.broadcast %14 : vector<1x256xf32> to vector<8x256xf32>
    %16 = arith.addf %13, %15 : vector<8x256xf32>
    %cst_10 = arith.constant 0.000000e+00 : f32
    %17 = vector.broadcast %cst_10 : f32 to vector<8x256xf32>
    %18 = arith.maximumf %16, %17 : vector<8x256xf32>
    %c0_11 = arith.constant 0 : index
    %c0_12 = arith.constant 0 : index
    %19 = vector.load %arg4[%c0_11, %c0_12] : memref<256x1024xf32, #tpu.memory_space<vmem>>, vector<256x256xf32>
    %cst_13 = arith.constant dense<0.000000e+00> : vector<8x256xf32>
    %20 = tpu.matmul %12, %19, %cst_13 {dimension_numbers = #tpu.dot_dimension_numbers<[1], [0], [0], [1], [0, 0, 1, 1], [], []>} : vector<8x256xf32>, vector<256x256xf32>, vector<8x256xf32> -> vector<8x256xf32>
    %21 = vector.extract_strided_slice %2 {offsets = [1, 0], sizes = [1, 256], strides = [1, 1]} : vector<8x256xf32> to vector<1x256xf32>
    %22 = vector.broadcast %21 : vector<1x256xf32> to vector<8x256xf32>
    %23 = arith.addf %20, %22 : vector<8x256xf32>
    %cst_14 = arith.constant 0.000000e+00 : f32
    %24 = vector.broadcast %cst_14 : f32 to vector<8x256xf32>
    %25 = arith.maximumf %23, %24 : vector<8x256xf32>
    %c0_15 = arith.constant 0 : index
    %c512 = arith.constant 512 : index
    %26 = vector.load %arg4[%c0_15, %c512] : memref<256x1024xf32, #tpu.memory_space<vmem>>, vector<256x256xf32>
    %cst_16 = arith.constant dense<0.000000e+00> : vector<8x256xf32>
    %27 = tpu.matmul %18, %26, %cst_16 {dimension_numbers = #tpu.dot_dimension_numbers<[1], [0], [0], [1], [0, 0, 1, 1], [], []>} : vector<8x256xf32>, vector<256x256xf32>, vector<8x256xf32> -> vector<8x256xf32>
    %28 = vector.extract_strided_slice %2 {offsets = [4, 0], sizes = [1, 256], strides = [1, 1]} : vector<8x256xf32> to vector<1x256xf32>
    %29 = vector.broadcast %28 : vector<1x256xf32> to vector<8x256xf32>
    %30 = arith.addf %27, %29 : vector<8x256xf32>
    %cst_17 = arith.constant 0.000000e+00 : f32
    %31 = vector.broadcast %cst_17 : f32 to vector<8x256xf32>
    %32 = arith.maximumf %30, %31 : vector<8x256xf32>
    %c0_18 = arith.constant 0 : index
    %c256 = arith.constant 256 : index
    %33 = vector.load %arg4[%c0_18, %c256] : memref<256x1024xf32, #tpu.memory_space<vmem>>, vector<256x256xf32>
    %cst_19 = arith.constant dense<0.000000e+00> : vector<8x256xf32>
    %34 = tpu.matmul %25, %33, %cst_19 {dimension_numbers = #tpu.dot_dimension_numbers<[1], [0], [0], [1], [0, 0, 1, 1], [], []>} : vector<8x256xf32>, vector<256x256xf32>, vector<8x256xf32> -> vector<8x256xf32>
    %35 = vector.extract_strided_slice %6 {offsets = [0, 0], sizes = [8, 256], strides = [1, 1]} : vector<8x512xf32> to vector<8x256xf32>
    %36 = arith.addf %34, %35 : vector<8x256xf32>
    %37 = vector.extract_strided_slice %2 {offsets = [2, 0], sizes = [1, 256], strides = [1, 1]} : vector<8x256xf32> to vector<1x256xf32>
    %38 = vector.broadcast %37 : vector<1x256xf32> to vector<8x256xf32>
    %39 = arith.addf %36, %38 : vector<8x256xf32>
    %cst_20 = arith.constant 0.000000e+00 : f32
    %40 = vector.broadcast %cst_20 : f32 to vector<8x256xf32>
    %41 = arith.maximumf %39, %40 : vector<8x256xf32>
    %c0_21 = arith.constant 0 : index
    %c768 = arith.constant 768 : index
    %42 = vector.load %arg4[%c0_21, %c768] : memref<256x1024xf32, #tpu.memory_space<vmem>>, vector<256x256xf32>
    %cst_22 = arith.constant dense<0.000000e+00> : vector<8x256xf32>
    %43 = tpu.matmul %32, %42, %cst_22 {dimension_numbers = #tpu.dot_dimension_numbers<[1], [0], [0], [1], [0, 0, 1, 1], [], []>} : vector<8x256xf32>, vector<256x256xf32>, vector<8x256xf32> -> vector<8x256xf32>
    %44 = vector.extract_strided_slice %6 {offsets = [0, 256], sizes = [8, 256], strides = [1, 1]} : vector<8x512xf32> to vector<8x256xf32>
    %45 = arith.addf %43, %44 : vector<8x256xf32>
    %46 = vector.extract_strided_slice %2 {offsets = [5, 0], sizes = [1, 256], strides = [1, 1]} : vector<8x256xf32> to vector<1x256xf32>
    %47 = vector.broadcast %46 : vector<1x256xf32> to vector<8x256xf32>
    %48 = arith.addf %45, %47 : vector<8x256xf32>
    %cst_23 = arith.constant 0.000000e+00 : f32
    %49 = vector.broadcast %cst_23 : f32 to vector<8x256xf32>
    %50 = arith.maximumf %48, %49 : vector<8x256xf32>
    %51 = tpu.concatenate %25, %41, %32, %50 in 1 : vector<8x256xf32>, vector<8x256xf32>, vector<8x256xf32>, vector<8x256xf32> -> vector<8x1024xf32>
    %c0_24 = arith.constant 0 : index
    %c0_25 = arith.constant 0 : index
    %52 = vector.load %arg5[%c0_24, %c0_25] : memref<1024x8xf32, #tpu.memory_space<vmem>>, vector<1024x8xf32>
    %cst_26 = arith.constant dense<0.000000e+00> : vector<8x8xf32>
    %53 = tpu.matmul %51, %52, %cst_26 {dimension_numbers = #tpu.dot_dimension_numbers<[1], [0], [0], [1], [0, 0, 1, 1], [], []>} : vector<8x1024xf32>, vector<1024x8xf32>, vector<8x8xf32> -> vector<8x8xf32>
    %c0_27 = arith.constant 0 : index
    %c0_28 = arith.constant 0 : index
    %54 = vector.load %arg7[%c0_27, %c0_28] : memref<1x8xf32, #tpu.memory_space<vmem>>, vector<1x8xf32>
    %55 = vector.broadcast %54 : vector<1x8xf32> to vector<8x8xf32>
    %56 = arith.addf %53, %55 : vector<8x8xf32>
    %c0_29 = arith.constant 0 : index
    %c0_30 = arith.constant 0 : index
    %57 = vector.load %arg8[%c0_29, %c0_30] : memref<8x8xf32, #tpu.memory_space<vmem>>, vector<8x8xf32>
    tpu.vector_store %arg8[%c0_29, %c0_30], %56 {strides = array<i32>} : memref<8x8xf32, #tpu.memory_space<vmem>>, vector<8x8xf32>,
    return
  }
  func.func @transform_0(%arg0: i32) -> (i32, i32) {
    %c0_i32 = arith.constant 0 : i32
    %c0_i32_0 = arith.constant 0 : i32
    return %arg0, %c0_i32 : i32, i32
  }
  func.func @transform_1(%arg0: i32) -> (i32, i32) {
    %c0_i32 = arith.constant 0 : i32
    %c0_i32_0 = arith.constant 0 : i32
    return %arg0, %c0_i32 : i32, i32
  }
  func.func @transform_2(%arg0: i32) -> (i32, i32) {
    %c0_i32 = arith.constant 0 : i32
    %c0_i32_0 = arith.constant 0 : i32
    %c0_i32_1 = arith.constant 0 : i32
    return %c0_i32, %c0_i32_0 : i32, i32
  }
  func.func @transform_3(%arg0: i32) -> (i32, i32) {
    %c0_i32 = arith.constant 0 : i32
    %c0_i32_0 = arith.constant 0 : i32
    %c0_i32_1 = arith.constant 0 : i32
    return %c0_i32, %c0_i32_0 : i32, i32
  }
  func.func @transform_4(%arg0: i32) -> (i32, i32) {
    %c0_i32 = arith.constant 0 : i32
    %c0_i32_0 = arith.constant 0 : i32
    %c0_i32_1 = arith.constant 0 : i32
    return %c0_i32, %c0_i32_0 : i32, i32
  }
  func.func @transform_5(%arg0: i32) -> (i32, i32) {
    %c0_i32 = arith.constant 0 : i32
    %c0_i32_0 = arith.constant 0 : i32
    %c0_i32_1 = arith.constant 0 : i32
    return %c0_i32, %c0_i32_0 : i32, i32
  }
  func.func @transform_6(%arg0: i32) -> (i32, i32) {
    %c0_i32 = arith.constant 0 : i32
    %c0_i32_0 = arith.constant 0 : i32
    %c0_i32_1 = arith.constant 0 : i32
    return %c0_i32, %c0_i32_0 : i32, i32
  }
  func.func @transform_7(%arg0: i32) -> (i32, i32) {
    %c0_i32 = arith.constant 0 : i32
    %c0_i32_0 = arith.constant 0 : i32
    return %arg0, %c0_i32 : i32, i32
  }
}

</mosaic_0001>

<llo_original>
// kernel: tpu_custom_call.1
$region0: #{tpu_custom_call.1}
  #allocation0 [shape = 'u32[]', space=smem, size = 0x4, offset = 0x4, fixed_abs, tag = 'smem constant byte address 0x4 - core index']
  #allocation1 [shape = 'u32[144,128]{1,0:T(1,128)}', space=vmem, size = 0x12000, scoped, tag = 'internal scratch']
  %s0 = inlined_call_operand.vmem [shape: f32[8,16], index: 0, kind: input, shape index: {}]
  %s1 = inlined_call_operand.vmem [shape: f32[8,8], index: 1, kind: input, shape index: {}]
  %s2 = inlined_call_operand.vmem [shape: f32[24,512], index: 2, kind: input, shape index: {}]
  %s3 = inlined_call_operand.hbm [shape: f32[256,1024], index: 3, kind: input, shape index: {}]
  %s4 = inlined_call_operand.vmem [shape: f32[1024,8], index: 4, kind: input, shape index: {}]
  %s5 = inlined_call_operand.vmem [shape: f32[8,256], index: 5, kind: input, shape index: {}]
  %s6 = inlined_call_operand.vmem [shape: f32[1,8], index: 6, kind: input, shape index: {}]
  %s7 = inlined_call_operand.hbm [shape: f32[8,8], index: 7, kind: output, shape index: {}]
  %s8 = sld [smem:[#allocation0]]
  $region42: #{tpu_custom_call.1} parent=0
    _
  %s10 = ssub.s32 1, %s8
  %s11 = scalar_select 0, %s10, %s8
  $region1: #{tpu_custom_call.1} parent=0
    #allocation2 [shape = 'u8[1048576]{0}', space=vmem, size = 0x100000, scoped, tag = 'input window, operand 3, single buffered']
    #allocation3 [shape = 's32[1]{0}', space=sflag, size = 0x4, scoped, tag = 'scoped memory for tpu_custom_call.1']
    #allocation4 [shape = 's32[1]{0}', space=sflag, size = 0x4, scoped, tag = 'scoped memory for tpu_custom_call.1']
    #allocation5 [shape = 'u8[4096]{0}', space=vmem, size = 0x1000, scoped, tag = 'output window, operand 0, single buffered']
    %12 = vsyncpa [#allocation3], 0
    %13 = vsyncpa [#allocation4], 0
    // Predicated region
    $region2: #{tpu_custom_call.1} parent=1 // pred_check
      _
    $region3: #{tpu_custom_call.1} parent=1 // pred_check_branch
      %15 = sbr.rel (0) target = $region5
    $region4: #{tpu_custom_call.1} parent=1 // pred_region
      _
    $region5: #{tpu_custom_call.1} parent=1 // pred_fallthru
      _
    // Predicated region
    $region6: #{tpu_custom_call.1} parent=1 // pred_check
      _
    $region7: #{tpu_custom_call.1} parent=1 // pred_check_branch
      %17 = sbr.rel (0) target = $region9
    $region8: #{tpu_custom_call.1} parent=1 // pred_region
      _
    $region9: #{tpu_custom_call.1} parent=1 // pred_fallthru
      _
    // Predicated region
    $region10: #{tpu_custom_call.1} parent=1 // pred_check
      _
    $region11: #{tpu_custom_call.1} parent=1 // pred_check_branch
      %19 = sbr.rel (0) target = $region13
    $region12: #{tpu_custom_call.1} parent=1 // pred_region
      _
    $region13: #{tpu_custom_call.1} parent=1 // pred_fallthru
      _
    // Predicated region
    $region14: #{tpu_custom_call.1} parent=1 // pred_check
      _
    $region15: #{tpu_custom_call.1} parent=1 // pred_check_branch
      %21 = sbr.rel (0) target = $region17
    $region16: #{tpu_custom_call.1} parent=1 // pred_region
      %s23 = ssub.s32 32768, 32768
      %24 = vsyncadd [#allocation3], %s23
      %s25 = sshll.u32 [#allocation2], 4
      %s26 = int_to_ptr.vmem [resolvable:$true] %s25
      %31 = dma.hbm_to_vmem [thread:$0]  %s3, 32768, %s26, [#allocation3], 1024, 1024, 64
    $region17: #{tpu_custom_call.1} parent=1 // pred_fallthru
      _
    // Predicated region
    $region18: #{tpu_custom_call.1} parent=1 // pred_check
      _
    $region19: #{tpu_custom_call.1} parent=1 // pred_check_branch
      %33 = sbr.rel (0) target = $region21
    $region20: #{tpu_custom_call.1} parent=1 // pred_region
      _
    $region21: #{tpu_custom_call.1} parent=1 // pred_fallthru
      _
    // Predicated region
    $region22: #{tpu_custom_call.1} parent=1 // pred_check
      _
    $region23: #{tpu_custom_call.1} parent=1 // pred_check_branch
      %35 = sbr.rel (0) target = $region25
    $region24: #{tpu_custom_call.1} parent=1 // pred_region
      _
    $region25: #{tpu_custom_call.1} parent=1 // pred_fallthru
      _
    // Predicated region
    $region26: #{tpu_custom_call.1} parent=1 // pred_check
      _
    $region27: #{tpu_custom_call.1} parent=1 // pred_check_branch
      %37 = sbr.rel (0) target = $region29
    $region28: #{tpu_custom_call.1} parent=1 // pred_region
      _
    $region29: #{tpu_custom_call.1} parent=1 // pred_fallthru
      _
    // Predicated region
    $region30: #{tpu_custom_call.1} parent=1 // pred_check
      _
    $region31: #{tpu_custom_call.1} parent=1 // pred_check_branch
      %39 = sbr.rel (0) target = $region33
    $region32: #{tpu_custom_call.1} parent=1 // pred_region
      %40 = dma.done [#allocation3], 32768
    $region33: #{tpu_custom_call.1} parent=1 // pred_fallthru
      _
    %v41 = vld [vmem:[%s0] sm:$0xff]
    %v42 = vld [vmem:[%s1] sm:$0xff]
    %v43 = vld [vmem:[%s5] sm:$0xff]
    %v44 = vld [vmem:[%s5 + $0x8] sm:$0xff]
    %v45 = vld [vmem:[%s2] sm:$0xff]
    %v46 = vld [vmem:[%s2 + $0x8] sm:$0xff]
    %v47 = vld [vmem:[%s2 + $0x10] sm:$0xff]
    %v48 = vld [vmem:[%s2 + $0x18] sm:$0xff]
    %v49 = vld [vmem:[%s2 + $0x20] sm:$0xff]
    %v50 = vld [vmem:[%s2 + $0x28] sm:$0xff]
    %v51 = vld [vmem:[%s2 + $0x30] sm:$0xff]
    %v52 = vld [vmem:[%s2 + $0x38] sm:$0xff]
    %vm53 = vcmask 130048
    %v55 = vsel %vm53, %v41, 0
    %57 = vmatprep.subr.mxu0 0.0
    %58 = vmatpush1.msra.mxu0 0.0
    %59 = vmatprep.subr.mxu0 0.0
    %60 = vmatpush1.msra.mxu0 0.0
    %61 = vmatprep.subr.mxu0 0.0
    %62 = vmatpush1.msra.mxu0 0.0
    %63 = vmatprep.subr.mxu0 0.0
    %64 = vmatpush1.msra.mxu0 0.0
    %65 = vmatprep.subr.mxu0 0.0
    %66 = vmatpush1.msra.mxu0 0.0
    %67 = vmatprep.subr.mxu0 0.0
    %68 = vmatpush1.msra.mxu0 0.0
    %69 = vmatprep.subr.mxu0 0.0
    %70 = vmatpush1.msra.mxu0 0.0
    %71 = vmatprep.subr.mxu0 0.0
    %72 = vmatpush1.msra.mxu0 0.0
    %73 = vmatprep.subr.mxu0 0.0
    %74 = vmatpush1.msra.mxu0 0.0
    %75 = vmatprep.subr.mxu0 0.0
    %76 = vmatpush1.msra.mxu0 0.0
    %77 = vmatprep.subr.mxu0 0.0
    %78 = vmatpush1.msra.mxu0 0.0
    %79 = vmatprep.subr.mxu0 0.0
    %80 = vmatpush1.msra.mxu0 0.0
    %81 = vmatprep.subr.mxu0 0.0
    %82 = vmatpush1.msra.mxu0 0.0
    %83 = vmatprep.subr.mxu0 0.0
    %84 = vmatpush1.msra.mxu0 0.0
    %85 = vmatprep.subr.mxu0 %v50
    %86 = vmatpush1.msra.mxu0 %v49
    %87 = vmatprep.subr.mxu0 %v46
    %88 = vmatpush1.msra.mxu0 %v45
    %89 = vmatprep.subr.mxu0 0.0
    %90 = vmatpush2.msra.mxu0 0.0
    %91 = vmatprep.subr.mxu0 0.0
    %92 = vmatpush2.msra.mxu0 0.0
    %93 = vmatprep.subr.mxu0 0.0
    %94 = vmatpush2.msra.mxu0 0.0
    %95 = vmatprep.subr.mxu0 0.0
    %96 = vmatpush2.msra.mxu0 0.0
    %97 = vmatprep.subr.mxu0 0.0
    %98 = vmatpush2.msra.mxu0 0.0
    %99 = vmatprep.subr.mxu0 0.0
    %100 = vmatpush2.msra.mxu0 0.0
    %101 = vmatprep.subr.mxu0 0.0
    %102 = vmatpush2.msra.mxu0 0.0
    %103 = vmatprep.subr.mxu0 0.0
    %104 = vmatpush2.msra.mxu0 0.0
    %105 = vmatprep.subr.mxu0 0.0
    %106 = vmatpush2.msra.mxu0 0.0
    %107 = vmatprep.subr.mxu0 0.0
    %108 = vmatpush2.msra.mxu0 0.0
    %109 = vmatprep.subr.mxu0 0.0
    %110 = vmatpush2.msra.mxu0 0.0
    %111 = vmatprep.subr.mxu0 0.0
    %112 = vmatpush2.msra.mxu0 0.0
    %113 = vmatprep.subr.mxu0 0.0
    %114 = vmatpush2.msra.mxu0 0.0
    %115 = vmatprep.subr.mxu0 0.0
    %116 = vmatpush2.msra.mxu0 0.0
    %117 = vmatprep.subr.mxu0 0.0
    %118 = vmatpush2.msra.mxu0 0.0
    %119 = vmatprep.subr.mxu0 0.0
    %120 = vmatpush2.msra.mxu0 0.0
    %121 = vmatprep.mubr.f32.mxu0 0.0
    %122 = vmatmul.mubr.f32.gmra.mxu0 %v55
    %v123 = vpop.f32.mrf.mxu0
    %v124 = vadd.f32 0.0, %v123
    %v125 = vpop.f32.mrf.mxu0
    %v126 = vadd.f32 0.0, %v125
    %127 = vdwg.mxu0
    %128 = vmatprep.subr.mxu0 0.0
    %129 = vmatpush1.msra.mxu0 0.0
    %130 = vmatprep.subr.mxu0 0.0
    %131 = vmatpush1.msra.mxu0 0.0
    %132 = vmatprep.subr.mxu0 0.0
    %133 = vmatpush1.msra.mxu0 0.0
    %134 = vmatprep.subr.mxu0 0.0
    %135 = vmatpush1.msra.mxu0 0.0
    %136 = vmatprep.subr.mxu0 0.0
    %137 = vmatpush1.msra.mxu0 0.0
    %138 = vmatprep.subr.mxu0 0.0
    %139 = vmatpush1.msra.mxu0 0.0
    %140 = vmatprep.subr.mxu0 0.0
    %141 = vmatpush1.msra.mxu0 0.0
    %142 = vmatprep.subr.mxu0 0.0
    %143 = vmatpush1.msra.mxu0 0.0
    %144 = vmatprep.subr.mxu0 0.0
    %145 = vmatpush1.msra.mxu0 0.0
    %146 = vmatprep.subr.mxu0 0.0
    %147 = vmatpush1.msra.mxu0 0.0
    %148 = vmatprep.subr.mxu0 0.0
    %149 = vmatpush1.msra.mxu0 0.0
    %150 = vmatprep.subr.mxu0 0.0
    %151 = vmatpush1.msra.mxu0 0.0
    %152 = vmatprep.subr.mxu0 0.0
    %153 = vmatpush1.msra.mxu0 0.0
    %154 = vmatprep.subr.mxu0 0.0
    %155 = vmatpush1.msra.mxu0 0.0
    %156 = vmatprep.subr.mxu0 %v52
    %157 = vmatpush1.msra.mxu0 %v51
    %158 = vmatprep.subr.mxu0 %v48
    %159 = vmatpush1.msra.mxu0 %v47
    %160 = vmatprep.subr.mxu0 0.0
    %161 = vmatpush2.msra.mxu0 0.0
    %162 = vmatprep.subr.mxu0 0.0
    %163 = vmatpush2.msra.mxu0 0.0
    %164 = vmatprep.subr.mxu0 0.0
    %165 = vmatpush2.msra.mxu0 0.0
    %166 = vmatprep.subr.mxu0 0.0
    %167 = vmatpush2.msra.mxu0 0.0
    %168 = vmatprep.subr.mxu0 0.0
    %169 = vmatpush2.msra.mxu0 0.0
    %170 = vmatprep.subr.mxu0 0.0
    %171 = vmatpush2.msra.mxu0 0.0
    %172 = vmatprep.subr.mxu0 0.0
    %173 = vmatpush2.msra.mxu0 0.0
    %174 = vmatprep.subr.mxu0 0.0
    %175 = vmatpush2.msra.mxu0 0.0
    %176 = vmatprep.subr.mxu0 0.0
    %177 = vmatpush2.msra.mxu0 0.0
    %178 = vmatprep.subr.mxu0 0.0
    %179 = vmatpush2.msra.mxu0 0.0
    %180 = vmatprep.subr.mxu0 0.0
    %181 = vmatpush2.msra.mxu0 0.0
    %182 = vmatprep.subr.mxu0 0.0
    %183 = vmatpush2.msra.mxu0 0.0
    %184 = vmatprep.subr.mxu0 0.0
    %185 = vmatpush2.msra.mxu0 0.0
    %186 = vmatprep.subr.mxu0 0.0
    %187 = vmatpush2.msra.mxu0 0.0
    %188 = vmatprep.subr.mxu0 0.0
    %189 = vmatpush2.msra.mxu0 0.0
    %190 = vmatprep.subr.mxu0 0.0
    %191 = vmatpush2.msra.mxu0 0.0
    %192 = vmatprep.mubr.f32.mxu0 0.0
    %193 = vmatmul.mubr.f32.gmra.mxu0 %v55
    %v194 = vpop.f32.mrf.mxu0
    %v195 = vadd.f32 0.0, %v194
    %v196 = vpop.f32.mrf.mxu0
    %v197 = vadd.f32 0.0, %v196
    %198 = vdwg.mxu0
    %v199 = vld [vmem:[%s2 + $0x40] sm:$0xff]
    %v200 = vld [vmem:[%s2 + $0x48] sm:$0xff]
    %v201 = vld [vmem:[%s2 + $0x50] sm:$0xff]
    %v202 = vld [vmem:[%s2 + $0x58] sm:$0xff]
    %vm203 = vcmask 64512
    %v205 = vsel %vm203, %v42, 0
    %207 = vmatprep.subr.mxu0 0.0
    %208 = vmatpush1.msra.mxu0 0.0
    %209 = vmatprep.subr.mxu0 0.0
    %210 = vmatpush1.msra.mxu0 0.0
    %211 = vmatprep.subr.mxu0 0.0
    %212 = vmatpush1.msra.mxu0 0.0
    %213 = vmatprep.subr.mxu0 0.0
    %214 = vmatpush1.msra.mxu0 0.0
    %215 = vmatprep.subr.mxu0 0.0
    %216 = vmatpush1.msra.mxu0 0.0
    %217 = vmatprep.subr.mxu0 0.0
    %218 = vmatpush1.msra.mxu0 0.0
    %219 = vmatprep.subr.mxu0 0.0
    %220 = vmatpush1.msra.mxu0 0.0
    %221 = vmatprep.subr.mxu0 0.0
    %222 = vmatpush1.msra.mxu0 0.0
    %223 = vmatprep.subr.mxu0 0.0
    %224 = vmatpush1.msra.mxu0 0.0
    %225 = vmatprep.subr.mxu0 0.0
    %226 = vmatpush1.msra.mxu0 0.0
    %227 = vmatprep.subr.mxu0 0.0
    %228 = vmatpush1.msra.mxu0 0.0
    %229 = vmatprep.subr.mxu0 0.0
    %230 = vmatpush1.msra.mxu0 0.0
    %231 = vmatprep.subr.mxu0 0.0
    %232 = vmatpush1.msra.mxu0 0.0
    %233 = vmatprep.subr.mxu0 0.0
    %234 = vmatpush1.msra.mxu0 0.0
    %235 = vmatprep.subr.mxu0 0.0
    %236 = vmatpush1.msra.mxu0 0.0
    %237 = vmatprep.subr.mxu0 %v200
    %238 = vmatpush1.msra.mxu0 %v199
    %239 = vmatprep.subr.mxu0 0.0
    %240 = vmatpush2.msra.mxu0 0.0
    %241 = vmatprep.subr.mxu0 0.0
    %242 = vmatpush2.msra.mxu0 0.0
    %243 = vmatprep.subr.mxu0 0.0
    %244 = vmatpush2.msra.mxu0 0.0
    %245 = vmatprep.subr.mxu0 0.0
    %246 = vmatpush2.msra.mxu0 0.0
    %247 = vmatprep.subr.mxu0 0.0
    %248 = vmatpush2.msra.mxu0 0.0
    %249 = vmatprep.subr.mxu0 0.0
    %250 = vmatpush2.msra.mxu0 0.0
    %251 = vmatprep.subr.mxu0 0.0
    %252 = vmatpush2.msra.mxu0 0.0
    %253 = vmatprep.subr.mxu0 0.0
    %254 = vmatpush2.msra.mxu0 0.0
    %255 = vmatprep.subr.mxu0 0.0
    %256 = vmatpush2.msra.mxu0 0.0
    %257 = vmatprep.subr.mxu0 0.0
    %258 = vmatpush2.msra.mxu0 0.0
    %259 = vmatprep.subr.mxu0 0.0
    %260 = vmatpush2.msra.mxu0 0.0
    %261 = vmatprep.subr.mxu0 0.0
    %262 = vmatpush2.msra.mxu0 0.0
    %263 = vmatprep.subr.mxu0 0.0
    %264 = vmatpush2.msra.mxu0 0.0
    %265 = vmatprep.subr.mxu0 0.0
    %266 = vmatpush2.msra.mxu0 0.0
    %267 = vmatprep.subr.mxu0 0.0
    %268 = vmatpush2.msra.mxu0 0.0
    %269 = vmatprep.subr.mxu0 0.0
    %270 = vmatpush2.msra.mxu0 0.0
    %271 = vmatprep.mubr.f32.mxu0 0.0
    %272 = vmatmul.mubr.f32.gmra.mxu0 %v205
    %v273 = vpop.f32.mrf.mxu0
    %v274 = vadd.f32 0.0, %v273
    %v275 = vpop.f32.mrf.mxu0
    %v276 = vadd.f32 0.0, %v275
    %277 = vdwg.mxu0
    %278 = vmatprep.subr.mxu0 0.0
    %279 = vmatpush1.msra.mxu0 0.0
    %280 = vmatprep.subr.mxu0 0.0
    %281 = vmatpush1.msra.mxu0 0.0
    %282 = vmatprep.subr.mxu0 0.0
    %283 = vmatpush1.msra.mxu0 0.0
    %284 = vmatprep.subr.mxu0 0.0
    %285 = vmatpush1.msra.mxu0 0.0
    %286 = vmatprep.subr.mxu0 0.0
    %287 = vmatpush1.msra.mxu0 0.0
    %288 = vmatprep.subr.mxu0 0.0
    %289 = vmatpush1.msra.mxu0 0.0
    %290 = vmatprep.subr.mxu0 0.0
    %291 = vmatpush1.msra.mxu0 0.0
    %292 = vmatprep.subr.mxu0 0.0
    %293 = vmatpush1.msra.mxu0 0.0
    %294 = vmatprep.subr.mxu0 0.0
    %295 = vmatpush1.msra.mxu0 0.0
    %296 = vmatprep.subr.mxu0 0.0
    %297 = vmatpush1.msra.mxu0 0.0
    %298 = vmatprep.subr.mxu0 0.0
    %299 = vmatpush1.msra.mxu0 0.0
    %300 = vmatprep.subr.mxu0 0.0
    %301 = vmatpush1.msra.mxu0 0.0
    %302 = vmatprep.subr.mxu0 0.0
    %303 = vmatpush1.msra.mxu0 0.0
    %304 = vmatprep.subr.mxu0 0.0
    %305 = vmatpush1.msra.mxu0 0.0
    %306 = vmatprep.subr.mxu0 0.0
    %307 = vmatpush1.msra.mxu0 0.0
    %308 = vmatprep.subr.mxu0 %v202
    %309 = vmatpush1.msra.mxu0 %v201
    %310 = vmatprep.subr.mxu0 0.0
    %311 = vmatpush2.msra.mxu0 0.0
    %312 = vmatprep.subr.mxu0 0.0
    %313 = vmatpush2.msra.mxu0 0.0
    %314 = vmatprep.subr.mxu0 0.0
    %315 = vmatpush2.msra.mxu0 0.0
    %316 = vmatprep.subr.mxu0 0.0
    %317 = vmatpush2.msra.mxu0 0.0
    %318 = vmatprep.subr.mxu0 0.0
    %319 = vmatpush2.msra.mxu0 0.0
    %320 = vmatprep.subr.mxu0 0.0
    %321 = vmatpush2.msra.mxu0 0.0
    %322 = vmatprep.subr.mxu0 0.0
    %323 = vmatpush2.msra.mxu0 0.0
    %324 = vmatprep.subr.mxu0 0.0
    %325 = vmatpush2.msra.mxu0 0.0
    %326 = vmatprep.subr.mxu0 0.0
    %327 = vmatpush2.msra.mxu0 0.0
    %328 = vmatprep.subr.mxu0 0.0
    %329 = vmatpush2.msra.mxu0 0.0
    %330 = vmatprep.subr.mxu0 0.0
    %331 = vmatpush2.msra.mxu0 0.0
    %332 = vmatprep.subr.mxu0 0.0
    %333 = vmatpush2.msra.mxu0 0.0
    %334 = vmatprep.subr.mxu0 0.0
    %335 = vmatpush2.msra.mxu0 0.0
    %336 = vmatprep.subr.mxu0 0.0
    %337 = vmatpush2.msra.mxu0 0.0
    %338 = vmatprep.subr.mxu0 0.0
    %339 = vmatpush2.msra.mxu0 0.0
    %340 = vmatprep.subr.mxu0 0.0
    %341 = vmatpush2.msra.mxu0 0.0
    %342 = vmatprep.mubr.f32.mxu0 0.0
    %343 = vmatmul.mubr.f32.gmra.mxu0 %v205
    %v344 = vpop.f32.mrf.mxu0
    %v345 = vadd.f32 0.0, %v344
    %v346 = vpop.f32.mrf.mxu0
    %v347 = vadd.f32 0.0, %v346
    %348 = vdwg.mxu0
    %v349 = vlaneseq
    %v350 = vshrl.u32 %v349, 7
    %v351 = vsub.s32 0, %v350
    %v352 = vrot.slane %v43, %v351
    %v353 = vlaneseq
    %v354 = vshrl.u32 %v353, 7
    %v355 = vsub.s32 0, %v354
    %v356 = vrot.slane %v44, %v355
    %v357 = vadd.f32 %v124, %v352
    %v358 = vadd.f32 %v126, %v356
    %v359 = vmax.f32 %v357, 0.0
    %v360 = vmax.f32 %v358, 0.0
    %v361 = vlaneseq
    %v362 = vshrl.u32 %v361, 7
    %v363 = vsub.s32 3, %v362
    %v364 = vrot.slane %v43, %v363
    %v365 = vlaneseq
    %v366 = vshrl.u32 %v365, 7
    %v367 = vsub.s32 3, %v366
    %v368 = vrot.slane %v44, %v367
    %v369 = vadd.f32 %v195, %v364
    %v370 = vadd.f32 %v197, %v368
    %v371 = vmax.f32 %v369, 0.0
    %v372 = vmax.f32 %v370, 0.0
    %v373 = vld [vmem:[#allocation2] sm:$0xff]
    %v374 = vld [vmem:[#allocation2 + $0x8] sm:$0xff]
    %v375 = vld [vmem:[#allocation2 + $0x40] sm:$0xff]
    %v376 = vld [vmem:[#allocation2 + $0x48] sm:$0xff]
    %v377 = vld [vmem:[#allocation2 + $0x80] sm:$0xff]
    %v378 = vld [vmem:[#allocation2 + $0x88] sm:$0xff]
    %v379 = vld [vmem:[#allocation2 + $0xc0] sm:$0xff]
    %v380 = vld [vmem:[#allocation2 + $0xc8] sm:$0xff]
    %v381 = vld [vmem:[#allocation2 + $0x100] sm:$0xff]
    %v382 = vld [vmem:[#allocation2 + $0x108] sm:$0xff]
    %v383 = vld [vmem:[#allocation2 + $0x140] sm:$0xff]
    %v384 = vld [vmem:[#allocation2 + $0x148] sm:$0xff]
    %v385 = vld [vmem:[#allocation2 + $0x180] sm:$0xff]
    %v386 = vld [vmem:[#allocation2 + $0x188] sm:$0xff]
    %v387 = vld [vmem:[#allocation2 + $0x1c0] sm:$0xff]
    %v388 = vld [vmem:[#allocation2 + $0x1c8] sm:$0xff]
    %v389 = vld [vmem:[#allocation2 + $0x200] sm:$0xff]
    %v390 = vld [vmem:[#allocation2 + $0x208] sm:$0xff]
    %v391 = vld [vmem:[#allocation2 + $0x240] sm:$0xff]
    %v392 = vld [vmem:[#allocation2 + $0x248] sm:$0xff]
    %v393 = vld [vmem:[#allocation2 + $0x280] sm:$0xff]
    %v394 = vld [vmem:[#allocation2 + $0x288] sm:$0xff]
    %v395 = vld [vmem:[#allocation2 + $0x2c0] sm:$0xff]
    %v396 = vld [vmem:[#allocation2 + $0x2c8] sm:$0xff]
    %v397 = vld [vmem:[#allocation2 + $0x300] sm:$0xff]
    %v398 = vld [vmem:[#allocation2 + $0x308] sm:$0xff]
    %v399 = vld [vmem:[#allocation2 + $0x340] sm:$0xff]
    %v400 = vld [vmem:[#allocation2 + $0x348] sm:$0xff]
    %v401 = vld [vmem:[#allocation2 + $0x380] sm:$0xff]
    %v402 = vld [vmem:[#allocation2 + $0x388] sm:$0xff]
    %v403 = vld [vmem:[#allocation2 + $0x3c0] sm:$0xff]
    %v404 = vld [vmem:[#allocation2 + $0x3c8] sm:$0xff]
    %v405 = vld [vmem:[#allocation2 + $0x400] sm:$0xff]
    %v406 = vld [vmem:[#allocation2 + $0x408] sm:$0xff]
    %v407 = vld [vmem:[#allocation2 + $0x440] sm:$0xff]
    %v408 = vld [vmem:[#allocation2 + $0x448] sm:$0xff]
    %v409 = vld [vmem:[#allocation2 + $0x480] sm:$0xff]
    %v410 = vld [vmem:[#allocation2 + $0x488] sm:$0xff]
    %v411 = vld [vmem:[#allocation2 + $0x4c0] sm:$0xff]
    %v412 = vld [vmem:[#allocation2 + $0x4c8] sm:$0xff]
    %v413 = vld [vmem:[#allocation2 + $0x500] sm:$0xff]
    %v414 = vld [vmem:[#allocation2 + $0x508] sm:$0xff]
    %v415 = vld [vmem:[#allocation2 + $0x540] sm:$0xff]
    %v416 = vld [vmem:[#allocation2 + $0x548] sm:$0xff]
    %v417 = vld [vmem:[#allocation2 + $0x580] sm:$0xff]
    %v418 = vld [vmem:[#allocation2 + $0x588] sm:$0xff]
    %v419 = vld [vmem:[#allocation2 + $0x5c0] sm:$0xff]
    %v420 = vld [vmem:[#allocation2 + $0x5c8] sm:$0xff]
    %v421 = vld [vmem:[#allocation2 + $0x600] sm:$0xff]
    %v422 = vld [vmem:[#allocation2 + $0x608] sm:$0xff]
    %v423 = vld [vmem:[#allocation2 + $0x640] sm:$0xff]
    %v424 = vld [vmem:[#allocation2 + $0x648] sm:$0xff]
    %v425 = vld [vmem:[#allocation2 + $0x680] sm:$0xff]
    %v426 = vld [vmem:[#allocation2 + $0x688] sm:$0xff]
    %v427 = vld [vmem:[#allocation2 + $0x6c0] sm:$0xff]
    %v428 = vld [vmem:[#allocation2 + $0x6c8] sm:$0xff]
    %v429 = vld [vmem:[#allocation2 + $0x700] sm:$0xff]
    %v430 = vld [vmem:[#allocation2 + $0x708] sm:$0xff]
    %v431 = vld [vmem:[#allocation2 + $0x740] sm:$0xff]
    %v432 = vld [vmem:[#allocation2 + $0x748] sm:$0xff]
    %v433 = vld [vmem:[#allocation2 + $0x780] sm:$0xff]
    %v434 = vld [vmem:[#allocation2 + $0x788] sm:$0xff]
    %v435 = vld [vmem:[#allocation2 + $0x7c0] sm:$0xff]
    %v436 = vld [vmem:[#allocation2 + $0x7c8] sm:$0xff]
    %v437 = vlaneseq
    %v438 = vshrl.u32 %v437, 7
    %v439 = vsub.s32 1, %v438
    %v440 = vrot.slane %v43, %v439
    %v441 = vlaneseq
    %v442 = vshrl.u32 %v441, 7
    %v443 = vsub.s32 1, %v442
    %v444 = vrot.slane %v44, %v443
    %445 = vmatprep.subr.mxu0 %v404
    %446 = vmatpush1.msra.mxu0 %v403
    %447 = vmatprep.subr.mxu0 %v402
    %448 = vmatpush1.msra.mxu0 %v401
    %449 = vmatprep.subr.mxu0 %v400
    %450 = vmatpush1.msra.mxu0 %v399
    %451 = vmatprep.subr.mxu0 %v398
    %452 = vmatpush1.msra.mxu0 %v397
    %453 = vmatprep.subr.mxu0 %v396
    %454 = vmatpush1.msra.mxu0 %v395
    %455 = vmatprep.subr.mxu0 %v394
    %456 = vmatpush1.msra.mxu0 %v393
    %457 = vmatprep.subr.mxu0 %v392
    %458 = vmatpush1.msra.mxu0 %v391
    %459 = vmatprep.subr.mxu0 %v390
    %460 = vmatpush1.msra.mxu0 %v389
    %461 = vmatprep.subr.mxu0 %v388
    %462 = vmatpush1.msra.mxu0 %v387
    %463 = vmatprep.subr.mxu0 %v386
    %464 = vmatpush1.msra.mxu0 %v385
    %465 = vmatprep.subr.mxu0 %v384
    %466 = vmatpush1.msra.mxu0 %v383
    %467 = vmatprep.subr.mxu0 %v382
    %468 = vmatpush1.msra.mxu0 %v381
    %469 = vmatprep.subr.mxu0 %v380
    %470 = vmatpush1.msra.mxu0 %v379
    %471 = vmatprep.subr.mxu0 %v378
    %472 = vmatpush1.msra.mxu0 %v377
    %473 = vmatprep.subr.mxu0 %v376
    %474 = vmatpush1.msra.mxu0 %v375
    %475 = vmatprep.subr.mxu0 %v374
    %476 = vmatpush1.msra.mxu0 %v373
    %477 = vmatprep.subr.mxu0 %v436
    %478 = vmatpush2.msra.mxu0 %v435
    %479 = vmatprep.subr.mxu0 %v434
    %480 = vmatpush2.msra.mxu0 %v433
    %481 = vmatprep.subr.mxu0 %v432
    %482 = vmatpush2.msra.mxu0 %v431
    %483 = vmatprep.subr.mxu0 %v430
    %484 = vmatpush2.msra.mxu0 %v429
    %485 = vmatprep.subr.mxu0 %v428
    %486 = vmatpush2.msra.mxu0 %v427
    %487 = vmatprep.subr.mxu0 %v426
    %488 = vmatpush2.msra.mxu0 %v425
    %489 = vmatprep.subr.mxu0 %v424
    %490 = vmatpush2.msra.mxu0 %v423
    %491 = vmatprep.subr.mxu0 %v422
    %492 = vmatpush2.msra.mxu0 %v421
    %493 = vmatprep.subr.mxu0 %v420
    %494 = vmatpush2.msra.mxu0 %v419
    %495 = vmatprep.subr.mxu0 %v418
    %496 = vmatpush2.msra.mxu0 %v417
    %497 = vmatprep.subr.mxu0 %v416
    %498 = vmatpush2.msra.mxu0 %v415
    %499 = vmatprep.subr.mxu0 %v414
    %500 = vmatpush2.msra.mxu0 %v413
    %501 = vmatprep.subr.mxu0 %v412
    %502 = vmatpush2.msra.mxu0 %v411
    %503 = vmatprep.subr.mxu0 %v410
    %504 = vmatpush2.msra.mxu0 %v409
    %505 = vmatprep.subr.mxu0 %v408
    %506 = vmatpush2.msra.mxu0 %v407
    %507 = vmatprep.subr.mxu0 %v406
    %508 = vmatpush2.msra.mxu0 %v405
    %509 = vmatprep.mubr.f32.mxu0 %v360
    %510 = vmatmul.mubr.f32.gmra.mxu0 %v359
    %v511 = vpop.f32.mrf.mxu0
    %v512 = vadd.f32 %v440, %v511
    %v513 = vpop.f32.mrf.mxu0
    %v514 = vadd.f32 %v444, %v513
    %515 = vdwg.mxu0
    %v516 = vmax.f32 %v512, 0.0
    %v517 = vmax.f32 %v514, 0.0
    %v518 = vld [vmem:[#allocation2 + $0x20] sm:$0xff]
    %v519 = vld [vmem:[#allocation2 + $0x28] sm:$0xff]
    %v520 = vld [vmem:[#allocation2 + $0x60] sm:$0xff]
    %v521 = vld [vmem:[#allocation2 + $0x68] sm:$0xff]
    %v522 = vld [vmem:[#allocation2 + $0xa0] sm:$0xff]
    %v523 = vld [vmem:[#allocation2 + $0xa8] sm:$0xff]
    %v524 = vld [vmem:[#allocation2 + $0xe0] sm:$0xff]
    %v525 = vld [vmem:[#allocation2 + $0xe8] sm:$0xff]
    %v526 = vld [vmem:[#allocation2 + $0x120] sm:$0xff]
    %v527 = vld [vmem:[#allocation2 + $0x128] sm:$0xff]
    %v528 = vld [vmem:[#allocation2 + $0x160] sm:$0xff]
    %v529 = vld [vmem:[#allocation2 + $0x168] sm:$0xff]
    %v530 = vld [vmem:[#allocation2 + $0x1a0] sm:$0xff]
    %v531 = vld [vmem:[#allocation2 + $0x1a8] sm:$0xff]
    %v532 = vld [vmem:[#allocation2 + $0x1e0] sm:$0xff]
    %v533 = vld [vmem:[#allocation2 + $0x1e8] sm:$0xff]
    %v534 = vld [vmem:[#allocation2 + $0x220] sm:$0xff]
    %v535 = vld [vmem:[#allocation2 + $0x228] sm:$0xff]
    %v536 = vld [vmem:[#allocation2 + $0x260] sm:$0xff]
    %v537 = vld [vmem:[#allocation2 + $0x268] sm:$0xff]
    %v538 = vld [vmem:[#allocation2 + $0x2a0] sm:$0xff]
    %v539 = vld [vmem:[#allocation2 + $0x2a8] sm:$0xff]
    %v540 = vld [vmem:[#allocation2 + $0x2e0] sm:$0xff]
    %v541 = vld [vmem:[#allocation2 + $0x2e8] sm:$0xff]
    %v542 = vld [vmem:[#allocation2 + $0x320] sm:$0xff]
    %v543 = vld [vmem:[#allocation2 + $0x328] sm:$0xff]
    %v544 = vld [vmem:[#allocation2 + $0x360] sm:$0xff]
    %v545 = vld [vmem:[#allocation2 + $0x368] sm:$0xff]
    %v546 = vld [vmem:[#allocation2 + $0x3a0] sm:$0xff]
    %v547 = vld [vmem:[#allocation2 + $0x3a8] sm:$0xff]
    %v548 = vld [vmem:[#allocation2 + $0x3e0] sm:$0xff]
    %v549 = vld [vmem:[#allocation2 + $0x3e8] sm:$0xff]
    %v550 = vld [vmem:[#allocation2 + $0x420] sm:$0xff]
    %v551 = vld [vmem:[#allocation2 + $0x428] sm:$0xff]
    %v552 = vld [vmem:[#allocation2 + $0x460] sm:$0xff]
    %v553 = vld [vmem:[#allocation2 + $0x468] sm:$0xff]
    %v554 = vld [vmem:[#allocation2 + $0x4a0] sm:$0xff]
    %v555 = vld [vmem:[#allocation2 + $0x4a8] sm:$0xff]
    %v556 = vld [vmem:[#allocation2 + $0x4e0] sm:$0xff]
    %v557 = vld [vmem:[#allocation2 + $0x4e8] sm:$0xff]
    %v558 = vld [vmem:[#allocation2 + $0x520] sm:$0xff]
    %v559 = vld [vmem:[#allocation2 + $0x528] sm:$0xff]
    %v560 = vld [vmem:[#allocation2 + $0x560] sm:$0xff]
    %v561 = vld [vmem:[#allocation2 + $0x568] sm:$0xff]
    %v562 = vld [vmem:[#allocation2 + $0x5a0] sm:$0xff]
    %v563 = vld [vmem:[#allocation2 + $0x5a8] sm:$0xff]
    %v564 = vld [vmem:[#allocation2 + $0x5e0] sm:$0xff]
    %v565 = vld [vmem:[#allocation2 + $0x5e8] sm:$0xff]
    %v566 = vld [vmem:[#allocation2 + $0x620] sm:$0xff]
    %v567 = vld [vmem:[#allocation2 + $0x628] sm:$0xff]
    %v568 = vld [vmem:[#allocation2 + $0x660] sm:$0xff]
    %v569 = vld [vmem:[#allocation2 + $0x668] sm:$0xff]
    %v570 = vld [vmem:[#allocation2 + $0x6a0] sm:$0xff]
    %v571 = vld [vmem:[#allocation2 + $0x6a8] sm:$0xff]
    %v572 = vld [vmem:[#allocation2 + $0x6e0] sm:$0xff]
    %v573 = vld [vmem:[#allocation2 + $0x6e8] sm:$0xff]
    %v574 = vld [vmem:[#allocation2 + $0x720] sm:$0xff]
    %v575 = vld [vmem:[#allocation2 + $0x728] sm:$0xff]
    %v576 = vld [vmem:[#allocation2 + $0x760] sm:$0xff]
    %v577 = vld [vmem:[#allocation2 + $0x768] sm:$0xff]
    %v578 = vld [vmem:[#allocation2 + $0x7a0] sm:$0xff]
    %v579 = vld [vmem:[#allocation2 + $0x7a8] sm:$0xff]
    %v580 = vld [vmem:[#allocation2 + $0x7e0] sm:$0xff]
    %v581 = vld [vmem:[#allocation2 + $0x7e8] sm:$0xff]
    %v582 = vlaneseq
    %v583 = vshrl.u32 %v582, 7
    %v584 = vsub.s32 4, %v583
    %v585 = vrot.slane %v43, %v584
    %v586 = vlaneseq
    %v587 = vshrl.u32 %v586, 7
    %v588 = vsub.s32 4, %v587
    %v589 = vrot.slane %v44, %v588
    %590 = vmatprep.subr.mxu0 %v549
    %591 = vmatpush1.msra.mxu0 %v548
    %592 = vmatprep.subr.mxu0 %v547
    %593 = vmatpush1.msra.mxu0 %v546
    %594 = vmatprep.subr.mxu0 %v545
    %595 = vmatpush1.msra.mxu0 %v544
    %596 = vmatprep.subr.mxu0 %v543
    %597 = vmatpush1.msra.mxu0 %v542
    %598 = vmatprep.subr.mxu0 %v541
    %599 = vmatpush1.msra.mxu0 %v540
    %600 = vmatprep.subr.mxu0 %v539
    %601 = vmatpush1.msra.mxu0 %v538
    %602 = vmatprep.subr.mxu0 %v537
    %603 = vmatpush1.msra.mxu0 %v536
    %604 = vmatprep.subr.mxu0 %v535
    %605 = vmatpush1.msra.mxu0 %v534
    %606 = vmatprep.subr.mxu0 %v533
    %607 = vmatpush1.msra.mxu0 %v532
    %608 = vmatprep.subr.mxu0 %v531
    %609 = vmatpush1.msra.mxu0 %v530
    %610 = vmatprep.subr.mxu0 %v529
    %611 = vmatpush1.msra.mxu0 %v528
    %612 = vmatprep.subr.mxu0 %v527
    %613 = vmatpush1.msra.mxu0 %v526
    %614 = vmatprep.subr.mxu0 %v525
    %615 = vmatpush1.msra.mxu0 %v524
    %616 = vmatprep.subr.mxu0 %v523
    %617 = vmatpush1.msra.mxu0 %v522
    %618 = vmatprep.subr.mxu0 %v521
    %619 = vmatpush1.msra.mxu0 %v520
    %620 = vmatprep.subr.mxu0 %v519
    %621 = vmatpush1.msra.mxu0 %v518
    %622 = vmatprep.subr.mxu0 %v581
    %623 = vmatpush2.msra.mxu0 %v580
    %624 = vmatprep.subr.mxu0 %v579
    %625 = vmatpush2.msra.mxu0 %v578
    %626 = vmatprep.subr.mxu0 %v577
    %627 = vmatpush2.msra.mxu0 %v576
    %628 = vmatprep.subr.mxu0 %v575
    %629 = vmatpush2.msra.mxu0 %v574
    %630 = vmatprep.subr.mxu0 %v573
    %631 = vmatpush2.msra.mxu0 %v572
    %632 = vmatprep.subr.mxu0 %v571
    %633 = vmatpush2.msra.mxu0 %v570
    %634 = vmatprep.subr.mxu0 %v569
    %635 = vmatpush2.msra.mxu0 %v568
    %636 = vmatprep.subr.mxu0 %v567
    %637 = vmatpush2.msra.mxu0 %v566
    %638 = vmatprep.subr.mxu0 %v565
    %639 = vmatpush2.msra.mxu0 %v564
    %640 = vmatprep.subr.mxu0 %v563
    %641 = vmatpush2.msra.mxu0 %v562
    %642 = vmatprep.subr.mxu0 %v561
    %643 = vmatpush2.msra.mxu0 %v560
    %644 = vmatprep.subr.mxu0 %v559
    %645 = vmatpush2.msra.mxu0 %v558
    %646 = vmatprep.subr.mxu0 %v557
    %647 = vmatpush2.msra.mxu0 %v556
    %648 = vmatprep.subr.mxu0 %v555
    %649 = vmatpush2.msra.mxu0 %v554
    %650 = vmatprep.subr.mxu0 %v553
    %651 = vmatpush2.msra.mxu0 %v552
    %652 = vmatprep.subr.mxu0 %v551
    %653 = vmatpush2.msra.mxu0 %v550
    %654 = vmatprep.mubr.f32.mxu0 %v372
    %655 = vmatmul.mubr.f32.gmra.mxu0 %v371
    %v656 = vpop.f32.mrf.mxu0
    %v657 = vadd.f32 %v585, %v656
    %v658 = vpop.f32.mrf.mxu0
    %v659 = vadd.f32 %v589, %v658
    %660 = vdwg.mxu0
    %v661 = vmax.f32 %v657, 0.0
    %v662 = vmax.f32 %v659, 0.0
    %v663 = vld [vmem:[#allocation2 + $0x10] sm:$0xff]
    %v664 = vld [vmem:[#allocation2 + $0x18] sm:$0xff]
    %v665 = vld [vmem:[#allocation2 + $0x50] sm:$0xff]
    %v666 = vld [vmem:[#allocation2 + $0x58] sm:$0xff]
    %v667 = vld [vmem:[#allocation2 + $0x90] sm:$0xff]
    %v668 = vld [vmem:[#allocation2 + $0x98] sm:$0xff]
    %v669 = vld [vmem:[#allocation2 + $0xd0] sm:$0xff]
    %v670 = vld [vmem:[#allocation2 + $0xd8] sm:$0xff]
    %v671 = vld [vmem:[#allocation2 + $0x110] sm:$0xff]
    %v672 = vld [vmem:[#allocation2 + $0x118] sm:$0xff]
    %v673 = vld [vmem:[#allocation2 + $0x150] sm:$0xff]
    %v674 = vld [vmem:[#allocation2 + $0x158] sm:$0xff]
    %v675 = vld [vmem:[#allocation2 + $0x190] sm:$0xff]
    %v676 = vld [vmem:[#allocation2 + $0x198] sm:$0xff]
    %v677 = vld [vmem:[#allocation2 + $0x1d0] sm:$0xff]
    %v678 = vld [vmem:[#allocation2 + $0x1d8] sm:$0xff]
    %v679 = vld [vmem:[#allocation2 + $0x210] sm:$0xff]
    %v680 = vld [vmem:[#allocation2 + $0x218] sm:$0xff]
    %v681 = vld [vmem:[#allocation2 + $0x250] sm:$0xff]
    %v682 = vld [vmem:[#allocation2 + $0x258] sm:$0xff]
    %v683 = vld [vmem:[#allocation2 + $0x290] sm:$0xff]
    %v684 = vld [vmem:[#allocation2 + $0x298] sm:$0xff]
    %v685 = vld [vmem:[#allocation2 + $0x2d0] sm:$0xff]
    %v686 = vld [vmem:[#allocation2 + $0x2d8] sm:$0xff]
    %v687 = vld [vmem:[#allocation2 + $0x310] sm:$0xff]
    %v688 = vld [vmem:[#allocation2 + $0x318] sm:$0xff]
    %v689 = vld [vmem:[#allocation2 + $0x350] sm:$0xff]
    %v690 = vld [vmem:[#allocation2 + $0x358] sm:$0xff]
    %v691 = vld [vmem:[#allocation2 + $0x390] sm:$0xff]
    %v692 = vld [vmem:[#allocation2 + $0x398] sm:$0xff]
    %v693 = vld [vmem:[#allocation2 + $0x3d0] sm:$0xff]
    %v694 = vld [vmem:[#allocation2 + $0x3d8] sm:$0xff]
    %v695 = vld [vmem:[#allocation2 + $0x410] sm:$0xff]
    %v696 = vld [vmem:[#allocation2 + $0x418] sm:$0xff]
    %v697 = vld [vmem:[#allocation2 + $0x450] sm:$0xff]
    %v698 = vld [vmem:[#allocation2 + $0x458] sm:$0xff]
    %v699 = vld [vmem:[#allocation2 + $0x490] sm:$0xff]
    %v700 = vld [vmem:[#allocation2 + $0x498] sm:$0xff]
    %v701 = vld [vmem:[#allocation2 + $0x4d0] sm:$0xff]
    %v702 = vld [vmem:[#allocation2 + $0x4d8] sm:$0xff]
    %v703 = vld [vmem:[#allocation2 + $0x510] sm:$0xff]
    %v704 = vld [vmem:[#allocation2 + $0x518] sm:$0xff]
    %v705 = vld [vmem:[#allocation2 + $0x550] sm:$0xff]
    %v706 = vld [vmem:[#allocation2 + $0x558] sm:$0xff]
    %v707 = vld [vmem:[#allocation2 + $0x590] sm:$0xff]
    %v708 = vld [vmem:[#allocation2 + $0x598] sm:$0xff]
    %v709 = vld [vmem:[#allocation2 + $0x5d0] sm:$0xff]
    %v710 = vld [vmem:[#allocation2 + $0x5d8] sm:$0xff]
    %v711 = vld [vmem:[#allocation2 + $0x610] sm:$0xff]
    %v712 = vld [vmem:[#allocation2 + $0x618] sm:$0xff]
    %v713 = vld [vmem:[#allocation2 + $0x650] sm:$0xff]
    %v714 = vld [vmem:[#allocation2 + $0x658] sm:$0xff]
    %v715 = vld [vmem:[#allocation2 + $0x690] sm:$0xff]
    %v716 = vld [vmem:[#allocation2 + $0x698] sm:$0xff]
    %v717 = vld [vmem:[#allocation2 + $0x6d0] sm:$0xff]
    %v718 = vld [vmem:[#allocation2 + $0x6d8] sm:$0xff]
    %v719 = vld [vmem:[#allocation2 + $0x710] sm:$0xff]
    %v720 = vld [vmem:[#allocation2 + $0x718] sm:$0xff]
    %v721 = vld [vmem:[#allocation2 + $0x750] sm:$0xff]
    %v722 = vld [vmem:[#allocation2 + $0x758] sm:$0xff]
    %v723 = vld [vmem:[#allocation2 + $0x790] sm:$0xff]
    %v724 = vld [vmem:[#allocation2 + $0x798] sm:$0xff]
    %v725 = vld [vmem:[#allocation2 + $0x7d0] sm:$0xff]
    %v726 = vld [vmem:[#allocation2 + $0x7d8] sm:$0xff]
    %727 = vmatprep.subr.mxu0 %v694
    %728 = vmatpush1.msra.mxu0 %v693
    %729 = vmatprep.subr.mxu0 %v692
    %730 = vmatpush1.msra.mxu0 %v691
    %731 = vmatprep.subr.mxu0 %v690
    %732 = vmatpush1.msra.mxu0 %v689
    %733 = vmatprep.subr.mxu0 %v688
    %734 = vmatpush1.msra.mxu0 %v687
    %735 = vmatprep.subr.mxu0 %v686
    %736 = vmatpush1.msra.mxu0 %v685
    %737 = vmatprep.subr.mxu0 %v684
    %738 = vmatpush1.msra.mxu0 %v683
    %739 = vmatprep.subr.mxu0 %v682
    %740 = vmatpush1.msra.mxu0 %v681
    %741 = vmatprep.subr.mxu0 %v680
    %742 = vmatpush1.msra.mxu0 %v679
    %743 = vmatprep.subr.mxu0 %v678
    %744 = vmatpush1.msra.mxu0 %v677
    %745 = vmatprep.subr.mxu0 %v676
    %746 = vmatpush1.msra.mxu0 %v675
    %747 = vmatprep.subr.mxu0 %v674
    %748 = vmatpush1.msra.mxu0 %v673
    %749 = vmatprep.subr.mxu0 %v672
    %750 = vmatpush1.msra.mxu0 %v671
    %751 = vmatprep.subr.mxu0 %v670
    %752 = vmatpush1.msra.mxu0 %v669
    %753 = vmatprep.subr.mxu0 %v668
    %754 = vmatpush1.msra.mxu0 %v667
    %755 = vmatprep.subr.mxu0 %v666
    %756 = vmatpush1.msra.mxu0 %v665
    %757 = vmatprep.subr.mxu0 %v664
    %758 = vmatpush1.msra.mxu0 %v663
    %759 = vmatprep.subr.mxu0 %v726
    %760 = vmatpush2.msra.mxu0 %v725
    %761 = vmatprep.subr.mxu0 %v724
    %762 = vmatpush2.msra.mxu0 %v723
    %763 = vmatprep.subr.mxu0 %v722
    %764 = vmatpush2.msra.mxu0 %v721
    %765 = vmatprep.subr.mxu0 %v720
    %766 = vmatpush2.msra.mxu0 %v719
    %767 = vmatprep.subr.mxu0 %v718
    %768 = vmatpush2.msra.mxu0 %v717
    %769 = vmatprep.subr.mxu0 %v716
    %770 = vmatpush2.msra.mxu0 %v715
    %771 = vmatprep.subr.mxu0 %v714
    %772 = vmatpush2.msra.mxu0 %v713
    %773 = vmatprep.subr.mxu0 %v712
    %774 = vmatpush2.msra.mxu0 %v711
    %775 = vmatprep.subr.mxu0 %v710
    %776 = vmatpush2.msra.mxu0 %v709
    %777 = vmatprep.subr.mxu0 %v708
    %778 = vmatpush2.msra.mxu0 %v707
    %779 = vmatprep.subr.mxu0 %v706
    %780 = vmatpush2.msra.mxu0 %v705
    %781 = vmatprep.subr.mxu0 %v704
    %782 = vmatpush2.msra.mxu0 %v703
    %783 = vmatprep.subr.mxu0 %v702
    %784 = vmatpush2.msra.mxu0 %v701
    %785 = vmatprep.subr.mxu0 %v700
    %786 = vmatpush2.msra.mxu0 %v699
    %787 = vmatprep.subr.mxu0 %v698
    %788 = vmatpush2.msra.mxu0 %v697
    %789 = vmatprep.subr.mxu0 %v696
    %790 = vmatpush2.msra.mxu0 %v695
    %791 = vmatprep.mubr.f32.mxu0 %v517
    %792 = vmatmul.mubr.f32.gmra.mxu0 %v516
    %v793 = vpop.f32.mrf.mxu0
    %v794 = vadd.f32 %v274, %v793
    %v795 = vpop.f32.mrf.mxu0
    %v796 = vadd.f32 %v276, %v795
    %797 = vdwg.mxu0
    %v798 = vlaneseq
    %v799 = vshrl.u32 %v798, 7
    %v800 = vsub.s32 2, %v799
    %v801 = vrot.slane %v43, %v800
    %v802 = vlaneseq
    %v803 = vshrl.u32 %v802, 7
    %v804 = vsub.s32 2, %v803
    %v805 = vrot.slane %v44, %v804
    %v806 = vadd.f32 %v794, %v801
    %v807 = vadd.f32 %v796, %v805
    %v808 = vmax.f32 %v806, 0.0
    %v809 = vmax.f32 %v807, 0.0
    %v810 = vld [vmem:[#allocation2 + $0x30] sm:$0xff]
    %v811 = vld [vmem:[#allocation2 + $0x38] sm:$0xff]
    %v812 = vld [vmem:[#allocation2 + $0x70] sm:$0xff]
    %v813 = vld [vmem:[#allocation2 + $0x78] sm:$0xff]
    %v814 = vld [vmem:[#allocation2 + $0xb0] sm:$0xff]
    %v815 = vld [vmem:[#allocation2 + $0xb8] sm:$0xff]
    %v816 = vld [vmem:[#allocation2 + $0xf0] sm:$0xff]
    %v817 = vld [vmem:[#allocation2 + $0xf8] sm:$0xff]
    %v818 = vld [vmem:[#allocation2 + $0x130] sm:$0xff]
    %v819 = vld [vmem:[#allocation2 + $0x138] sm:$0xff]
    %v820 = vld [vmem:[#allocation2 + $0x170] sm:$0xff]
    %v821 = vld [vmem:[#allocation2 + $0x178] sm:$0xff]
    %v822 = vld [vmem:[#allocation2 + $0x1b0] sm:$0xff]
    %v823 = vld [vmem:[#allocation2 + $0x1b8] sm:$0xff]
    %v824 = vld [vmem:[#allocation2 + $0x1f0] sm:$0xff]
    %v825 = vld [vmem:[#allocation2 + $0x1f8] sm:$0xff]
    %v826 = vld [vmem:[#allocation2 + $0x230] sm:$0xff]
    %v827 = vld [vmem:[#allocation2 + $0x238] sm:$0xff]
    %v828 = vld [vmem:[#allocation2 + $0x270] sm:$0xff]
    %v829 = vld [vmem:[#allocation2 + $0x278] sm:$0xff]
    %v830 = vld [vmem:[#allocation2 + $0x2b0] sm:$0xff]
    %v831 = vld [vmem:[#allocation2 + $0x2b8] sm:$0xff]
    %v832 = vld [vmem:[#allocation2 + $0x2f0] sm:$0xff]
    %v833 = vld [vmem:[#allocation2 + $0x2f8] sm:$0xff]
    %v834 = vld [vmem:[#allocation2 + $0x330] sm:$0xff]
    %v835 = vld [vmem:[#allocation2 + $0x338] sm:$0xff]
    %v836 = vld [vmem:[#allocation2 + $0x370] sm:$0xff]
    %v837 = vld [vmem:[#allocation2 + $0x378] sm:$0xff]
    %v838 = vld [vmem:[#allocation2 + $0x3b0] sm:$0xff]
    %v839 = vld [vmem:[#allocation2 + $0x3b8] sm:$0xff]
    %v840 = vld [vmem:[#allocation2 + $0x3f0] sm:$0xff]
    %v841 = vld [vmem:[#allocation2 + $0x3f8] sm:$0xff]
    %v842 = vld [vmem:[#allocation2 + $0x430] sm:$0xff]
    %v843 = vld [vmem:[#allocation2 + $0x438] sm:$0xff]
    %v844 = vld [vmem:[#allocation2 + $0x470] sm:$0xff]
    %v845 = vld [vmem:[#allocation2 + $0x478] sm:$0xff]
    %v846 = vld [vmem:[#allocation2 + $0x4b0] sm:$0xff]
    %v847 = vld [vmem:[#allocation2 + $0x4b8] sm:$0xff]
    %v848 = vld [vmem:[#allocation2 + $0x4f0] sm:$0xff]
    %v849 = vld [vmem:[#allocation2 + $0x4f8] sm:$0xff]
    %v850 = vld [vmem:[#allocation2 + $0x530] sm:$0xff]
    %v851 = vld [vmem:[#allocation2 + $0x538] sm:$0xff]
    %v852 = vld [vmem:[#allocation2 + $0x570] sm:$0xff]
    %v853 = vld [vmem:[#allocation2 + $0x578] sm:$0xff]
    %v854 = vld [vmem:[#allocation2 + $0x5b0] sm:$0xff]
    %v855 = vld [vmem:[#allocation2 + $0x5b8] sm:$0xff]
    %v856 = vld [vmem:[#allocation2 + $0x5f0] sm:$0xff]
    %v857 = vld [vmem:[#allocation2 + $0x5f8] sm:$0xff]
    %v858 = vld [vmem:[#allocation2 + $0x630] sm:$0xff]
    %v859 = vld [vmem:[#allocation2 + $0x638] sm:$0xff]
    %v860 = vld [vmem:[#allocation2 + $0x670] sm:$0xff]
    %v861 = vld [vmem:[#allocation2 + $0x678] sm:$0xff]
    %v862 = vld [vmem:[#allocation2 + $0x6b0] sm:$0xff]
    %v863 = vld [vmem:[#allocation2 + $0x6b8] sm:$0xff]
    %v864 = vld [vmem:[#allocation2 + $0x6f0] sm:$0xff]
    %v865 = vld [vmem:[#allocation2 + $0x6f8] sm:$0xff]
    %v866 = vld [vmem:[#allocation2 + $0x730] sm:$0xff]
    %v867 = vld [vmem:[#allocation2 + $0x738] sm:$0xff]
    %v868 = vld [vmem:[#allocation2 + $0x770] sm:$0xff]
    %v869 = vld [vmem:[#allocation2 + $0x778] sm:$0xff]
    %v870 = vld [vmem:[#allocation2 + $0x7b0] sm:$0xff]
    %v871 = vld [vmem:[#allocation2 + $0x7b8] sm:$0xff]
    %v872 = vld [vmem:[#allocation2 + $0x7f0] sm:$0xff]
    %v873 = vld [vmem:[#allocation2 + $0x7f8] sm:$0xff]
    %874 = vmatprep.subr.mxu0 %v841
    %875 = vmatpush1.msra.mxu0 %v840
    %876 = vmatprep.subr.mxu0 %v839
    %877 = vmatpush1.msra.mxu0 %v838
    %878 = vmatprep.subr.mxu0 %v837
    %879 = vmatpush1.msra.mxu0 %v836
    %880 = vmatprep.subr.mxu0 %v835
    %881 = vmatpush1.msra.mxu0 %v834
    %882 = vmatprep.subr.mxu0 %v833
    %883 = vmatpush1.msra.mxu0 %v832
    %884 = vmatprep.subr.mxu0 %v831
    %885 = vmatpush1.msra.mxu0 %v830
    %886 = vmatprep.subr.mxu0 %v829
    %887 = vmatpush1.msra.mxu0 %v828
    %888 = vmatprep.subr.mxu0 %v827
    %889 = vmatpush1.msra.mxu0 %v826
    %890 = vmatprep.subr.mxu0 %v825
    %891 = vmatpush1.msra.mxu0 %v824
    %892 = vmatprep.subr.mxu0 %v823
    %893 = vmatpush1.msra.mxu0 %v822
    %894 = vmatprep.subr.mxu0 %v821
    %895 = vmatpush1.msra.mxu0 %v820
    %896 = vmatprep.subr.mxu0 %v819
    %897 = vmatpush1.msra.mxu0 %v818
    %898 = vmatprep.subr.mxu0 %v817
    %899 = vmatpush1.msra.mxu0 %v816
    %900 = vmatprep.subr.mxu0 %v815
    %901 = vmatpush1.msra.mxu0 %v814
    %902 = vmatprep.subr.mxu0 %v813
    %903 = vmatpush1.msra.mxu0 %v812
    %904 = vmatprep.subr.mxu0 %v811
    %905 = vmatpush1.msra.mxu0 %v810
    %906 = vmatprep.subr.mxu0 %v873
    %907 = vmatpush2.msra.mxu0 %v872
    %908 = vmatprep.subr.mxu0 %v871
    %909 = vmatpush2.msra.mxu0 %v870
    %910 = vmatprep.subr.mxu0 %v869
    %911 = vmatpush2.msra.mxu0 %v868
    %912 = vmatprep.subr.mxu0 %v867
    %913 = vmatpush2.msra.mxu0 %v866
    %914 = vmatprep.subr.mxu0 %v865
    %915 = vmatpush2.msra.mxu0 %v864
    %916 = vmatprep.subr.mxu0 %v863
    %917 = vmatpush2.msra.mxu0 %v862
    %918 = vmatprep.subr.mxu0 %v861
    %919 = vmatpush2.msra.mxu0 %v860
    %920 = vmatprep.subr.mxu0 %v859
    %921 = vmatpush2.msra.mxu0 %v858
    %922 = vmatprep.subr.mxu0 %v857
    %923 = vmatpush2.msra.mxu0 %v856
    %924 = vmatprep.subr.mxu0 %v855
    %925 = vmatpush2.msra.mxu0 %v854
    %926 = vmatprep.subr.mxu0 %v853
    %927 = vmatpush2.msra.mxu0 %v852
    %928 = vmatprep.subr.mxu0 %v851
    %929 = vmatpush2.msra.mxu0 %v850
    %930 = vmatprep.subr.mxu0 %v849
    %931 = vmatpush2.msra.mxu0 %v848
    %932 = vmatprep.subr.mxu0 %v847
    %933 = vmatpush2.msra.mxu0 %v846
    %934 = vmatprep.subr.mxu0 %v845
    %935 = vmatpush2.msra.mxu0 %v844
    %936 = vmatprep.subr.mxu0 %v843
    %937 = vmatpush2.msra.mxu0 %v842
    %938 = vmatprep.mubr.f32.mxu0 %v662
    %939 = vmatmul.mubr.f32.gmra.mxu0 %v661
    %v940 = vpop.f32.mrf.mxu0
    %v941 = vadd.f32 %v345, %v940
    %v942 = vpop.f32.mrf.mxu0
    %v943 = vadd.f32 %v347, %v942
    %944 = vdwg.mxu0
    %v945 = vlaneseq
    %v946 = vshrl.u32 %v945, 7
    %v947 = vsub.s32 5, %v946
    %v948 = vrot.slane %v43, %v947
    %v949 = vlaneseq
    %v950 = vshrl.u32 %v949, 7
    %v951 = vsub.s32 5, %v950
    %v952 = vrot.slane %v44, %v951
    %v953 = vadd.f32 %v941, %v948
    %v954 = vadd.f32 %v943, %v952
    %v955 = vmax.f32 %v953, 0.0
    %v956 = vmax.f32 %v954, 0.0
    %v957 = vld [vmem:[%s4] sm:$0xff]
    %v958 = vld [vmem:[%s4 + $0x8] sm:$0xff]
    %v959 = vld [vmem:[%s4 + $0x10] sm:$0xff]
    %v960 = vld [vmem:[%s4 + $0x18] sm:$0xff]
    %v961 = vld [vmem:[%s4 + $0x20] sm:$0xff]
    %v962 = vld [vmem:[%s4 + $0x28] sm:$0xff]
    %v963 = vld [vmem:[%s4 + $0x30] sm:$0xff]
    %v964 = vld [vmem:[%s4 + $0x38] sm:$0xff]
    %v965 = vld [vmem:[%s4 + $0x40] sm:$0xff]
    %v966 = vld [vmem:[%s4 + $0x48] sm:$0xff]
    %v967 = vld [vmem:[%s4 + $0x50] sm:$0xff]
    %v968 = vld [vmem:[%s4 + $0x58] sm:$0xff]
    %v969 = vld [vmem:[%s4 + $0x60] sm:$0xff]
    %v970 = vld [vmem:[%s4 + $0x68] sm:$0xff]
    %v971 = vld [vmem:[%s4 + $0x70] sm:$0xff]
    %v972 = vld [vmem:[%s4 + $0x78] sm:$0xff]
    %v973 = vld [vmem:[%s4 + $0x80] sm:$0xff]
    %v974 = vld [vmem:[%s4 + $0x88] sm:$0xff]
    %v975 = vld [vmem:[%s4 + $0x90] sm:$0xff]
    %v976 = vld [vmem:[%s4 + $0x98] sm:$0xff]
    %v977 = vld [vmem:[%s4 + $0xa0] sm:$0xff]
    %v978 = vld [vmem:[%s4 + $0xa8] sm:$0xff]
    %v979 = vld [vmem:[%s4 + $0xb0] sm:$0xff]
    %v980 = vld [vmem:[%s4 + $0xb8] sm:$0xff]
    %v981 = vld [vmem:[%s4 + $0xc0] sm:$0xff]
    %v982 = vld [vmem:[%s4 + $0xc8] sm:$0xff]
    %v983 = vld [vmem:[%s4 + $0xd0] sm:$0xff]
    %v984 = vld [vmem:[%s4 + $0xd8] sm:$0xff]
    %v985 = vld [vmem:[%s4 + $0xe0] sm:$0xff]
    %v986 = vld [vmem:[%s4 + $0xe8] sm:$0xff]
    %v987 = vld [vmem:[%s4 + $0xf0] sm:$0xff]
    %v988 = vld [vmem:[%s4 + $0xf8] sm:$0xff]
    %v989 = vld [vmem:[%s4 + $0x100] sm:$0xff]
    %v990 = vld [vmem:[%s4 + $0x108] sm:$0xff]
    %v991 = vld [vmem:[%s4 + $0x110] sm:$0xff]
    %v992 = vld [vmem:[%s4 + $0x118] sm:$0xff]
    %v993 = vld [vmem:[%s4 + $0x120] sm:$0xff]
    %v994 = vld [vmem:[%s4 + $0x128] sm:$0xff]
    %v995 = vld [vmem:[%s4 + $0x130] sm:$0xff]
    %v996 = vld [vmem:[%s4 + $0x138] sm:$0xff]
    %v997 = vld [vmem:[%s4 + $0x140] sm:$0xff]
    %v998 = vld [vmem:[%s4 + $0x148] sm:$0xff]
    %v999 = vld [vmem:[%s4 + $0x150] sm:$0xff]
    %v1000 = vld [vmem:[%s4 + $0x158] sm:$0xff]
    %v1001 = vld [vmem:[%s4 + $0x160] sm:$0xff]
    %v1002 = vld [vmem:[%s4 + $0x168] sm:$0xff]
    %v1003 = vld [vmem:[%s4 + $0x170] sm:$0xff]
    %v1004 = vld [vmem:[%s4 + $0x178] sm:$0xff]
    %v1005 = vld [vmem:[%s4 + $0x180] sm:$0xff]
    %v1006 = vld [vmem:[%s4 + $0x188] sm:$0xff]
    %v1007 = vld [vmem:[%s4 + $0x190] sm:$0xff]
    %v1008 = vld [vmem:[%s4 + $0x198] sm:$0xff]
    %v1009 = vld [vmem:[%s4 + $0x1a0] sm:$0xff]
    %v1010 = vld [vmem:[%s4 + $0x1a8] sm:$0xff]
    %v1011 = vld [vmem:[%s4 + $0x1b0] sm:$0xff]
    %v1012 = vld [vmem:[%s4 + $0x1b8] sm:$0xff]
    %v1013 = vld [vmem:[%s4 + $0x1c0] sm:$0xff]
    %v1014 = vld [vmem:[%s4 + $0x1c8] sm:$0xff]
    %v1015 = vld [vmem:[%s4 + $0x1d0] sm:$0xff]
    %v1016 = vld [vmem:[%s4 + $0x1d8] sm:$0xff]
    %v1017 = vld [vmem:[%s4 + $0x1e0] sm:$0xff]
    %v1018 = vld [vmem:[%s4 + $0x1e8] sm:$0xff]
    %v1019 = vld [vmem:[%s4 + $0x1f0] sm:$0xff]
    %v1020 = vld [vmem:[%s4 + $0x1f8] sm:$0xff]
    %v1021 = vld [vmem:[%s4 + $0x200] sm:$0xff]
    %v1022 = vld [vmem:[%s4 + $0x208] sm:$0xff]
    %v1023 = vld [vmem:[%s4 + $0x210] sm:$0xff]
    %v1024 = vld [vmem:[%s4 + $0x218] sm:$0xff]
    %v1025 = vld [vmem:[%s4 + $0x220] sm:$0xff]
    %v1026 = vld [vmem:[%s4 + $0x228] sm:$0xff]
    %v1027 = vld [vmem:[%s4 + $0x230] sm:$0xff]
    %v1028 = vld [vmem:[%s4 + $0x238] sm:$0xff]
    %v1029 = vld [vmem:[%s4 + $0x240] sm:$0xff]
    %v1030 = vld [vmem:[%s4 + $0x248] sm:$0xff]
    %v1031 = vld [vmem:[%s4 + $0x250] sm:$0xff]
    %v1032 = vld [vmem:[%s4 + $0x258] sm:$0xff]
    %v1033 = vld [vmem:[%s4 + $0x260] sm:$0xff]
    %v1034 = vld [vmem:[%s4 + $0x268] sm:$0xff]
    %v1035 = vld [vmem:[%s4 + $0x270] sm:$0xff]
    %v1036 = vld [vmem:[%s4 + $0x278] sm:$0xff]
    %v1037 = vld [vmem:[%s4 + $0x280] sm:$0xff]
    %v1038 = vld [vmem:[%s4 + $0x288] sm:$0xff]
    %v1039 = vld [vmem:[%s4 + $0x290] sm:$0xff]
    %v1040 = vld [vmem:[%s4 + $0x298] sm:$0xff]
    %v1041 = vld [vmem:[%s4 + $0x2a0] sm:$0xff]
    %v1042 = vld [vmem:[%s4 + $0x2a8] sm:$0xff]
    %v1043 = vld [vmem:[%s4 + $0x2b0] sm:$0xff]
    %v1044 = vld [vmem:[%s4 + $0x2b8] sm:$0xff]
    %v1045 = vld [vmem:[%s4 + $0x2c0] sm:$0xff]
    %v1046 = vld [vmem:[%s4 + $0x2c8] sm:$0xff]
    %v1047 = vld [vmem:[%s4 + $0x2d0] sm:$0xff]
    %v1048 = vld [vmem:[%s4 + $0x2d8] sm:$0xff]
    %v1049 = vld [vmem:[%s4 + $0x2e0] sm:$0xff]
    %v1050 = vld [vmem:[%s4 + $0x2e8] sm:$0xff]
    %v1051 = vld [vmem:[%s4 + $0x2f0] sm:$0xff]
    %v1052 = vld [vmem:[%s4 + $0x2f8] sm:$0xff]
    %v1053 = vld [vmem:[%s4 + $0x300] sm:$0xff]
    %v1054 = vld [vmem:[%s4 + $0x308] sm:$0xff]
    %v1055 = vld [vmem:[%s4 + $0x310] sm:$0xff]
    %v1056 = vld [vmem:[%s4 + $0x318] sm:$0xff]
    %v1057 = vld [vmem:[%s4 + $0x320] sm:$0xff]
    %v1058 = vld [vmem:[%s4 + $0x328] sm:$0xff]
    %v1059 = vld [vmem:[%s4 + $0x330] sm:$0xff]
    %v1060 = vld [vmem:[%s4 + $0x338] sm:$0xff]
    %v1061 = vld [vmem:[%s4 + $0x340] sm:$0xff]
    %v1062 = vld [vmem:[%s4 + $0x348] sm:$0xff]
    %v1063 = vld [vmem:[%s4 + $0x350] sm:$0xff]
    %v1064 = vld [vmem:[%s4 + $0x358] sm:$0xff]
    %v1065 = vld [vmem:[%s4 + $0x360] sm:$0xff]
    %v1066 = vld [vmem:[%s4 + $0x368] sm:$0xff]
    %v1067 = vld [vmem:[%s4 + $0x370] sm:$0xff]
    %v1068 = vld [vmem:[%s4 + $0x378] sm:$0xff]
    %v1069 = vld [vmem:[%s4 + $0x380] sm:$0xff]
    %v1070 = vld [vmem:[%s4 + $0x388] sm:$0xff]
    %v1071 = vld [vmem:[%s4 + $0x390] sm:$0xff]
    %v1072 = vld [vmem:[%s4 + $0x398] sm:$0xff]
    %v1073 = vld [vmem:[%s4 + $0x3a0] sm:$0xff]
    %v1074 = vld [vmem:[%s4 + $0x3a8] sm:$0xff]
    %v1075 = vld [vmem:[%s4 + $0x3b0] sm:$0xff]
    %v1076 = vld [vmem:[%s4 + $0x3b8] sm:$0xff]
    %v1077 = vld [vmem:[%s4 + $0x3c0] sm:$0xff]
    %v1078 = vld [vmem:[%s4 + $0x3c8] sm:$0xff]
    %v1079 = vld [vmem:[%s4 + $0x3d0] sm:$0xff]
    %v1080 = vld [vmem:[%s4 + $0x3d8] sm:$0xff]
    %v1081 = vld [vmem:[%s4 + $0x3e0] sm:$0xff]
    %v1082 = vld [vmem:[%s4 + $0x3e8] sm:$0xff]
    %v1083 = vld [vmem:[%s4 + $0x3f0] sm:$0xff]
    %v1084 = vld [vmem:[%s4 + $0x3f8] sm:$0xff]
    %v1085 = vld [vmem:[%s6] sm:$0x1]
    %v1087 = vlaneseq
    %v1088 = vshrl.u32 %v1087, 7
    %v1089 = vsub.s32 0, %v1088
    %v1090 = vrot.slane %v1085, %v1089
    %1092 = vmatprep.subr.mxu0 0.0
    %1093 = vmatpush1.msra.mxu0 %v972
    %1094 = vmatprep.subr.mxu0 0.0
    %1095 = vmatpush1.msra.mxu0 %v971
    %1096 = vmatprep.subr.mxu0 0.0
    %1097 = vmatpush1.msra.mxu0 %v970
    %1098 = vmatprep.subr.mxu0 0.0
    %1099 = vmatpush1.msra.mxu0 %v969
    %1100 = vmatprep.subr.mxu0 0.0
    %1101 = vmatpush1.msra.mxu0 %v968
    %1102 = vmatprep.subr.mxu0 0.0
    %1103 = vmatpush1.msra.mxu0 %v967
    %1104 = vmatprep.subr.mxu0 0.0
    %1105 = vmatpush1.msra.mxu0 %v966
    %1106 = vmatprep.subr.mxu0 0.0
    %1107 = vmatpush1.msra.mxu0 %v965
    %1108 = vmatprep.subr.mxu0 0.0
    %1109 = vmatpush1.msra.mxu0 %v964
    %1110 = vmatprep.subr.mxu0 0.0
    %1111 = vmatpush1.msra.mxu0 %v963
    %1112 = vmatprep.subr.mxu0 0.0
    %1113 = vmatpush1.msra.mxu0 %v962
    %1114 = vmatprep.subr.mxu0 0.0
    %1115 = vmatpush1.msra.mxu0 %v961
    %1116 = vmatprep.subr.mxu0 0.0
    %1117 = vmatpush1.msra.mxu0 %v960
    %1118 = vmatprep.subr.mxu0 0.0
    %1119 = vmatpush1.msra.mxu0 %v959
    %1120 = vmatprep.subr.mxu0 0.0
    %1121 = vmatpush1.msra.mxu0 %v958
    %1122 = vmatprep.subr.mxu0 0.0
    %1123 = vmatpush1.msra.mxu0 %v957
    %1124 = vmatprep.subr.mxu0 0.0
    %1125 = vmatpush2.msra.mxu0 %v988
    %1126 = vmatprep.subr.mxu0 0.0
    %1127 = vmatpush2.msra.mxu0 %v987
    %1128 = vmatprep.subr.mxu0 0.0
    %1129 = vmatpush2.msra.mxu0 %v986
    %1130 = vmatprep.subr.mxu0 0.0
    %1131 = vmatpush2.msra.mxu0 %v985
    %1132 = vmatprep.subr.mxu0 0.0
    %1133 = vmatpush2.msra.mxu0 %v984
    %1134 = vmatprep.subr.mxu0 0.0
    %1135 = vmatpush2.msra.mxu0 %v983
    %1136 = vmatprep.subr.mxu0 0.0
    %1137 = vmatpush2.msra.mxu0 %v982
    %1138 = vmatprep.subr.mxu0 0.0
    %1139 = vmatpush2.msra.mxu0 %v981
    %1140 = vmatprep.subr.mxu0 0.0
    %1141 = vmatpush2.msra.mxu0 %v980
    %1142 = vmatprep.subr.mxu0 0.0
    %1143 = vmatpush2.msra.mxu0 %v979
    %1144 = vmatprep.subr.mxu0 0.0
    %1145 = vmatpush2.msra.mxu0 %v978
    %1146 = vmatprep.subr.mxu0 0.0
    %1147 = vmatpush2.msra.mxu0 %v977
    %1148 = vmatprep.subr.mxu0 0.0
    %1149 = vmatpush2.msra.mxu0 %v976
    %1150 = vmatprep.subr.mxu0 0.0
    %1151 = vmatpush2.msra.mxu0 %v975
    %1152 = vmatprep.subr.mxu0 0.0
    %1153 = vmatpush2.msra.mxu0 %v974
    %1154 = vmatprep.subr.mxu0 0.0
    %1155 = vmatpush2.msra.mxu0 %v973
    %1156 = vmatprep.mubr.f32.mxu0 %v517
    %1157 = vmatmul.mubr.f32.gmra.mxu0 %v516
    %v1158 = vpop.f32.mrf.mxu0
    %v1159 = vadd.f32 %v1090, %v1158
    %v1160 = vpop.f32.mrf.mxu0
    %1161 = vdwg.mxu0
    %1162 = vmatprep.subr.mxu0 0.0
    %1163 = vmatpush1.msra.mxu0 %v1004
    %1164 = vmatprep.subr.mxu0 0.0
    %1165 = vmatpush1.msra.mxu0 %v1003
    %1166 = vmatprep.subr.mxu0 0.0
    %1167 = vmatpush1.msra.mxu0 %v1002
    %1168 = vmatprep.subr.mxu0 0.0
    %1169 = vmatpush1.msra.mxu0 %v1001
    %1170 = vmatprep.subr.mxu0 0.0
    %1171 = vmatpush1.msra.mxu0 %v1000
    %1172 = vmatprep.subr.mxu0 0.0
    %1173 = vmatpush1.msra.mxu0 %v999
    %1174 = vmatprep.subr.mxu0 0.0
    %1175 = vmatpush1.msra.mxu0 %v998
    %1176 = vmatprep.subr.mxu0 0.0
    %1177 = vmatpush1.msra.mxu0 %v997
    %1178 = vmatprep.subr.mxu0 0.0
    %1179 = vmatpush1.msra.mxu0 %v996
    %1180 = vmatprep.subr.mxu0 0.0
    %1181 = vmatpush1.msra.mxu0 %v995
    %1182 = vmatprep.subr.mxu0 0.0
    %1183 = vmatpush1.msra.mxu0 %v994
    %1184 = vmatprep.subr.mxu0 0.0
    %1185 = vmatpush1.msra.mxu0 %v993
    %1186 = vmatprep.subr.mxu0 0.0
    %1187 = vmatpush1.msra.mxu0 %v992
    %1188 = vmatprep.subr.mxu0 0.0
    %1189 = vmatpush1.msra.mxu0 %v991
    %1190 = vmatprep.subr.mxu0 0.0
    %1191 = vmatpush1.msra.mxu0 %v990
    %1192 = vmatprep.subr.mxu0 0.0
    %1193 = vmatpush1.msra.mxu0 %v989
    %1194 = vmatprep.subr.mxu0 0.0
    %1195 = vmatpush2.msra.mxu0 %v1020
    %1196 = vmatprep.subr.mxu0 0.0
    %1197 = vmatpush2.msra.mxu0 %v1019
    %1198 = vmatprep.subr.mxu0 0.0
    %1199 = vmatpush2.msra.mxu0 %v1018
    %1200 = vmatprep.subr.mxu0 0.0
    %1201 = vmatpush2.msra.mxu0 %v1017
    %1202 = vmatprep.subr.mxu0 0.0
    %1203 = vmatpush2.msra.mxu0 %v1016
    %1204 = vmatprep.subr.mxu0 0.0
    %1205 = vmatpush2.msra.mxu0 %v1015
    %1206 = vmatprep.subr.mxu0 0.0
    %1207 = vmatpush2.msra.mxu0 %v1014
    %1208 = vmatprep.subr.mxu0 0.0
    %1209 = vmatpush2.msra.mxu0 %v1013
    %1210 = vmatprep.subr.mxu0 0.0
    %1211 = vmatpush2.msra.mxu0 %v1012
    %1212 = vmatprep.subr.mxu0 0.0
    %1213 = vmatpush2.msra.mxu0 %v1011
    %1214 = vmatprep.subr.mxu0 0.0
    %1215 = vmatpush2.msra.mxu0 %v1010
    %1216 = vmatprep.subr.mxu0 0.0
    %1217 = vmatpush2.msra.mxu0 %v1009
    %1218 = vmatprep.subr.mxu0 0.0
    %1219 = vmatpush2.msra.mxu0 %v1008
    %1220 = vmatprep.subr.mxu0 0.0
    %1221 = vmatpush2.msra.mxu0 %v1007
    %1222 = vmatprep.subr.mxu0 0.0
    %1223 = vmatpush2.msra.mxu0 %v1006
    %1224 = vmatprep.subr.mxu0 0.0
    %1225 = vmatpush2.msra.mxu0 %v1005
    %1226 = vmatprep.mubr.f32.mxu0 %v809
    %1227 = vmatmul.mubr.f32.gmra.mxu0 %v808
    %v1228 = vpop.f32.mrf.mxu0
    %v1229 = vadd.f32 %v1159, %v1228
    %v1230 = vpop.f32.mrf.mxu0
    %1231 = vdwg.mxu0
    %1232 = vmatprep.subr.mxu0 0.0
    %1233 = vmatpush1.msra.mxu0 %v1036
    %1234 = vmatprep.subr.mxu0 0.0
    %1235 = vmatpush1.msra.mxu0 %v1035
    %1236 = vmatprep.subr.mxu0 0.0
    %1237 = vmatpush1.msra.mxu0 %v1034
    %1238 = vmatprep.subr.mxu0 0.0
    %1239 = vmatpush1.msra.mxu0 %v1033
    %1240 = vmatprep.subr.mxu0 0.0
    %1241 = vmatpush1.msra.mxu0 %v1032
    %1242 = vmatprep.subr.mxu0 0.0
    %1243 = vmatpush1.msra.mxu0 %v1031
    %1244 = vmatprep.subr.mxu0 0.0
    %1245 = vmatpush1.msra.mxu0 %v1030
    %1246 = vmatprep.subr.mxu0 0.0
    %1247 = vmatpush1.msra.mxu0 %v1029
    %1248 = vmatprep.subr.mxu0 0.0
    %1249 = vmatpush1.msra.mxu0 %v1028
    %1250 = vmatprep.subr.mxu0 0.0
    %1251 = vmatpush1.msra.mxu0 %v1027
    %1252 = vmatprep.subr.mxu0 0.0
    %1253 = vmatpush1.msra.mxu0 %v1026
    %1254 = vmatprep.subr.mxu0 0.0
    %1255 = vmatpush1.msra.mxu0 %v1025
    %1256 = vmatprep.subr.mxu0 0.0
    %1257 = vmatpush1.msra.mxu0 %v1024
    %1258 = vmatprep.subr.mxu0 0.0
    %1259 = vmatpush1.msra.mxu0 %v1023
    %1260 = vmatprep.subr.mxu0 0.0
    %1261 = vmatpush1.msra.mxu0 %v1022
    %1262 = vmatprep.subr.mxu0 0.0
    %1263 = vmatpush1.msra.mxu0 %v1021
    %1264 = vmatprep.subr.mxu0 0.0
    %1265 = vmatpush2.msra.mxu0 %v1052
    %1266 = vmatprep.subr.mxu0 0.0
    %1267 = vmatpush2.msra.mxu0 %v1051
    %1268 = vmatprep.subr.mxu0 0.0
    %1269 = vmatpush2.msra.mxu0 %v1050
    %1270 = vmatprep.subr.mxu0 0.0
    %1271 = vmatpush2.msra.mxu0 %v1049
    %1272 = vmatprep.subr.mxu0 0.0
    %1273 = vmatpush2.msra.mxu0 %v1048
    %1274 = vmatprep.subr.mxu0 0.0
    %1275 = vmatpush2.msra.mxu0 %v1047
    %1276 = vmatprep.subr.mxu0 0.0
    %1277 = vmatpush2.msra.mxu0 %v1046
    %1278 = vmatprep.subr.mxu0 0.0
    %1279 = vmatpush2.msra.mxu0 %v1045
    %1280 = vmatprep.subr.mxu0 0.0
    %1281 = vmatpush2.msra.mxu0 %v1044
    %1282 = vmatprep.subr.mxu0 0.0
    %1283 = vmatpush2.msra.mxu0 %v1043
    %1284 = vmatprep.subr.mxu0 0.0
    %1285 = vmatpush2.msra.mxu0 %v1042
    %1286 = vmatprep.subr.mxu0 0.0
    %1287 = vmatpush2.msra.mxu0 %v1041
    %1288 = vmatprep.subr.mxu0 0.0
    %1289 = vmatpush2.msra.mxu0 %v1040
    %1290 = vmatprep.subr.mxu0 0.0
    %1291 = vmatpush2.msra.mxu0 %v1039
    %1292 = vmatprep.subr.mxu0 0.0
    %1293 = vmatpush2.msra.mxu0 %v1038
    %1294 = vmatprep.subr.mxu0 0.0
    %1295 = vmatpush2.msra.mxu0 %v1037
    %1296 = vmatprep.mubr.f32.mxu0 %v662
    %1297 = vmatmul.mubr.f32.gmra.mxu0 %v661
    %v1298 = vpop.f32.mrf.mxu0
    %v1299 = vadd.f32 %v1229, %v1298
    %v1300 = vpop.f32.mrf.mxu0
    %1301 = vdwg.mxu0
    %1302 = vmatprep.subr.mxu0 0.0
    %1303 = vmatpush1.msra.mxu0 %v1068
    %1304 = vmatprep.subr.mxu0 0.0
    %1305 = vmatpush1.msra.mxu0 %v1067
    %1306 = vmatprep.subr.mxu0 0.0
    %1307 = vmatpush1.msra.mxu0 %v1066
    %1308 = vmatprep.subr.mxu0 0.0
    %1309 = vmatpush1.msra.mxu0 %v1065
    %1310 = vmatprep.subr.mxu0 0.0
    %1311 = vmatpush1.msra.mxu0 %v1064
    %1312 = vmatprep.subr.mxu0 0.0
    %1313 = vmatpush1.msra.mxu0 %v1063
    %1314 = vmatprep.subr.mxu0 0.0
    %1315 = vmatpush1.msra.mxu0 %v1062
    %1316 = vmatprep.subr.mxu0 0.0
    %1317 = vmatpush1.msra.mxu0 %v1061
    %1318 = vmatprep.subr.mxu0 0.0
    %1319 = vmatpush1.msra.mxu0 %v1060
    %1320 = vmatprep.subr.mxu0 0.0
    %1321 = vmatpush1.msra.mxu0 %v1059
    %1322 = vmatprep.subr.mxu0 0.0
    %1323 = vmatpush1.msra.mxu0 %v1058
    %1324 = vmatprep.subr.mxu0 0.0
    %1325 = vmatpush1.msra.mxu0 %v1057
    %1326 = vmatprep.subr.mxu0 0.0
    %1327 = vmatpush1.msra.mxu0 %v1056
    %1328 = vmatprep.subr.mxu0 0.0
    %1329 = vmatpush1.msra.mxu0 %v1055
    %1330 = vmatprep.subr.mxu0 0.0
    %1331 = vmatpush1.msra.mxu0 %v1054
    %1332 = vmatprep.subr.mxu0 0.0
    %1333 = vmatpush1.msra.mxu0 %v1053
    %1334 = vmatprep.subr.mxu0 0.0
    %1335 = vmatpush2.msra.mxu0 %v1084
    %1336 = vmatprep.subr.mxu0 0.0
    %1337 = vmatpush2.msra.mxu0 %v1083
    %1338 = vmatprep.subr.mxu0 0.0
    %1339 = vmatpush2.msra.mxu0 %v1082
    %1340 = vmatprep.subr.mxu0 0.0
    %1341 = vmatpush2.msra.mxu0 %v1081
    %1342 = vmatprep.subr.mxu0 0.0
    %1343 = vmatpush2.msra.mxu0 %v1080
    %1344 = vmatprep.subr.mxu0 0.0
    %1345 = vmatpush2.msra.mxu0 %v1079
    %1346 = vmatprep.subr.mxu0 0.0
    %1347 = vmatpush2.msra.mxu0 %v1078
    %1348 = vmatprep.subr.mxu0 0.0
    %1349 = vmatpush2.msra.mxu0 %v1077
    %1350 = vmatprep.subr.mxu0 0.0
    %1351 = vmatpush2.msra.mxu0 %v1076
    %1352 = vmatprep.subr.mxu0 0.0
    %1353 = vmatpush2.msra.mxu0 %v1075
    %1354 = vmatprep.subr.mxu0 0.0
    %1355 = vmatpush2.msra.mxu0 %v1074
    %1356 = vmatprep.subr.mxu0 0.0
    %1357 = vmatpush2.msra.mxu0 %v1073
    %1358 = vmatprep.subr.mxu0 0.0
    %1359 = vmatpush2.msra.mxu0 %v1072
    %1360 = vmatprep.subr.mxu0 0.0
    %1361 = vmatpush2.msra.mxu0 %v1071
    %1362 = vmatprep.subr.mxu0 0.0
    %1363 = vmatpush2.msra.mxu0 %v1070
    %1364 = vmatprep.subr.mxu0 0.0
    %1365 = vmatpush2.msra.mxu0 %v1069
    %1366 = vmatprep.mubr.f32.mxu0 %v956
    %1367 = vmatmul.mubr.f32.gmra.mxu0 %v955
    %v1368 = vpop.f32.mrf.mxu0
    %v1369 = vadd.f32 %v1299, %v1368
    %v1370 = vpop.f32.mrf.mxu0
    %1371 = vdwg.mxu0
    %1372 = vst.msk [vmem:[#allocation5] sm:$0xff] %vm203, %v1369
    // Predicated region
    $region34: #{tpu_custom_call.1} parent=1 // pred_check
      _
    $region35: #{tpu_custom_call.1} parent=1 // pred_check_branch
      %1374 = sbr.rel (0) target = $region37
    $region36: #{tpu_custom_call.1} parent=1 // pred_region
      %s1376 = ssub.s32 128, 128
      %1377 = vsyncadd [#allocation4], %s1376
      %s1379 = sshll.u32 [#allocation5], 4
      %s1380 = int_to_ptr.vmem [resolvable:$true] %s1379
      %1382 = dma.vmem_to_hbm [thread:$0]  %s1380, 128, %s7, [#allocation4]
    $region37: #{tpu_custom_call.1} parent=1 // pred_fallthru
      _
    // Predicated region
    $region38: #{tpu_custom_call.1} parent=1 // pred_check
      _
    $region39: #{tpu_custom_call.1} parent=1 // pred_check_branch
      %1384 = sbr.rel (0) target = $region41
    $region40: #{tpu_custom_call.1} parent=1 // pred_region
      %1385 = dma.done [#allocation4], 128
    $region41: #{tpu_custom_call.1} parent=1 // pred_fallthru
      _
    %1386 = vsyncpa [#allocation3], 1
    %1387 = vsyncpa [#allocation4], 1

</llo_original>
